<compile_context>
chip_gen: v5e
topology: v5e:2x2
jax: 0.10.0
libtpu: 0.0.40
codegen_flags: <defaults>
</compile_context>

<pallas_src>
import jax
import jax.numpy as jnp
from jax.experimental import pallas as pl
from jax.experimental.pallas import tpu as pltpu


def _pivot_kernel(x_ref, vec_ref, wcat_ref, bt_ref, out_ref):
    # x_ref:    (TILE_B, F)  input tile (VMEM)
    # vec_ref:  (1, F)       StraightThroughLayer vector (VMEM, broadcast over batch)
    # wcat_ref: (F, 2)       packed [w_task | w_domain] columns (VMEM)
    # bt_ref:   (1,)         task bias (SMEM scalar path)
    # out_ref:  (TILE_B, 2)  col 0 = task prediction, col 1 = domain prediction
    x = x_ref[...].astype(jnp.float32)
    vec = vec_ref[...].astype(jnp.float32)              # (1, F) -> broadcast to (TILE_B, F)
    feat = jnp.maximum(x * vec, 0.0)                    # StraightThrough mul + ReLU

    w = wcat_ref[...].astype(jnp.float32)               # (F, 2)
    # One MXU matmul produces both logits at once.
    logits = jnp.dot(
        feat, w,
        preferred_element_type=jnp.float32,
        precision=jax.lax.Precision.HIGHEST,
    )                                                   # (TILE_B, 2)

    # Bias applies only to the task column (column 0).
    bt = bt_ref[0]
    col = jax.lax.broadcasted_iota(jnp.int32, logits.shape, dimension=1)
    logits = logits + jnp.where(col == 0, bt, jnp.float32(0.0))

    # ReverseLayerF is identity in forward; alpha has no effect here.
    out_ref[...] = jax.nn.sigmoid(logits).astype(out_ref.dtype)


_SUBLANE_ALIGN = 32  # covers f32 (8), bf16 (16) and int8/fp8 (32) sublane packing


def _choose_tile_b(batch, feat, itemsize):
    # Target ~2 MiB per x tile: big enough to hide DMA latency and amortize the
    # ~0.35 us per grid-step overhead; small enough that double-buffered input
    # tiles stay far below v7x's 64 MiB VMEM (32 MiB scoped default).
    target_bytes = 2 * 1024 * 1024
    tile = target_bytes // max(1, feat * itemsize)
    tile = max(_SUBLANE_ALIGN, min(int(tile), 4096))
    tile = (tile // _SUBLANE_ALIGN) * _SUBLANE_ALIGN
    b_aligned = ((batch + _SUBLANE_ALIGN - 1) // _SUBLANE_ALIGN) * _SUBLANE_ALIGN
    return min(tile, b_aligned)


def pivot_learner_forward(x, vector, w_task, b_task, w_domain, alpha=1.0):
    """Pallas forward of PivotLearnerModel.

    Returns (task_prediction, domain_prediction), each (B, 1) float32.
    `alpha` only affects gradients (ReverseLayerF), not forward values.
    Inputs may be stored in bf16 (the kernel upcasts to f32 internally).
    """
    del alpha  # identity in forward
    B, F = x.shape

    # Pack [w_task ; w_domain] into one (F, 2) operand for a single MXU dot.
    w_cat = jnp.concatenate(
        [jnp.reshape(w_task, (1, F)), jnp.reshape(w_domain, (1, F))], axis=0
    ).T.astype(x.dtype)                                  # (F, 2)
    vector = jnp.reshape(vector, (1, F)).astype(x.dtype)
    b_task_1d = jnp.reshape(b_task, (1,)).astype(jnp.float32)

    tile_b = _choose_tile_b(B, F, x.dtype.itemsize)
    b_pad = pl.cdiv(B, tile_b) * tile_b
    if b_pad != B:
        # Zero-padded rows produce harmless values that are sliced off below.
        x = jnp.pad(x, ((0, b_pad - B), (0, 0)))

    out = pl.pallas_call(
        _pivot_kernel,
        out_shape=jax.ShapeDtypeStruct((b_pad, 2), jnp.float32),
        grid=(b_pad // tile_b,),
        in_specs=[
            pl.BlockSpec((tile_b, F), lambda i: (i, 0)),        # x: batch-tiled
            pl.BlockSpec((1, F), lambda i: (0, 0)),             # vector: resident
            pl.BlockSpec((F, 2), lambda i: (0, 0)),             # packed weights: resident
            pl.BlockSpec(memory_space=pltpu.MemorySpace.SMEM),  # b_task scalar
        ],
        out_specs=pl.BlockSpec((tile_b, 2), lambda i: (i, 0)),
        compiler_params=pltpu.CompilerParams(
            # Batch tiles are independent -> shard across both v7x TensorCores.
            dimension_semantics=("parallel",),
        ),
    )(x, vector, w_cat, b_task_1d)

    task_pred = out[:B, 0:1]
    dom_pred = out[:B, 1:2]
    return task_pred, dom_pred


def _reference_forward(x, vector, w_task, b_task, w_domain):
    xf = x.astype(jnp.float32)
    vf = jnp.reshape(vector, (1, -1)).astype(jnp.float32)
    feat = jnp.maximum(xf * vf, 0.0)
    wt = jnp.reshape(w_task, (1, -1)).astype(jnp.float32)
    wd = jnp.reshape(w_domain, (1, -1)).astype(jnp.float32)
    bt = jnp.reshape(b_task, (1,)).astype(jnp.float32)
    task = jax.nn.sigmoid(
        jnp.dot(feat, wt.T, precision=jax.lax.Precision.HIGHEST) + bt)
    dom = jax.nn.sigmoid(
        jnp.dot(feat, wd.T, precision=jax.lax.Precision.HIGHEST))
    return task, dom


if __name__ == "__main__":
    # Small but non-trivial shapes: batch not a multiple of the tile size
    # (exercises the padding path), features = 128 (one full lane width).
    B, F = 300, 128
    key = jax.random.PRNGKey(0)
    kx, kv, kwt, kbt, kwd = jax.random.split(key, 5)

    x = jax.random.normal(kx, (B, F), dtype=jnp.float32)
    vector = jax.random.normal(kv, (1, F), dtype=jnp.float32)          # StraightThroughLayer.vector
    w_task = jax.random.normal(kwt, (1, F), dtype=jnp.float32) * 0.1   # Linear(F,1).weight
    b_task = jax.random.normal(kbt, (1,), dtype=jnp.float32) * 0.1     # Linear(F,1).bias
    w_domain = jax.random.normal(kwd, (1, F), dtype=jnp.float32) * 0.1 # Linear(F,1,bias=False).weight

    # f32 storage path.
    task_pred, dom_pred = pivot_learner_forward(x, vector, w_task, b_task, w_domain, alpha=0.5)
    jax.block_until_ready((task_pred, dom_pred))
    task_ref, dom_ref = _reference_forward(x, vector, w_task, b_task, w_domain)
    assert task_pred.shape == (B, 1) and dom_pred.shape == (B, 1)
    assert jnp.allclose(task_pred, task_ref, atol=1e-4, rtol=1e-4)
    assert jnp.allclose(dom_pred, dom_ref, atol=1e-4, rtol=1e-4)

    # bf16 HBM-storage path (kernel computes in f32 after the cast; halves the
    # HBM bytes read for this bandwidth-bound workload).
    x_bf = x.astype(jnp.bfloat16)
    vec_bf = vector.astype(jnp.bfloat16)
    wt_bf = w_task.astype(jnp.bfloat16)
    wd_bf = w_domain.astype(jnp.bfloat16)
    task_bf, dom_bf = pivot_learner_forward(x_bf, vec_bf, wt_bf, b_task, wd_bf, alpha=0.5)
    jax.block_until_ready((task_bf, dom_bf))
    task_ref_bf, dom_ref_bf = _reference_forward(x_bf, vec_bf, wt_bf, b_task, wd_bf)
    assert jnp.allclose(task_bf, task_ref_bf, atol=2e-3, rtol=2e-3)
    assert jnp.allclose(dom_bf, dom_ref_bf, atol=2e-3, rtol=2e-3)

    print("KERNEL_OK")
</pallas_src>

<mosaic_0001>
module attributes {stable_mosaic.version = 11 : i64} {
  func.func @_pivot_kernel(%arg0: i32, %arg1: memref<320x128xf32, #tpu.memory_space<vmem>>, %arg2: memref<1x128xf32, #tpu.memory_space<vmem>>, %arg3: memref<128x2xf32, #tpu.memory_space<vmem>>, %arg4: memref<1xf32, #tpu.memory_space<smem>>, %arg5: memref<320x2xf32, #tpu.memory_space<vmem>>) attributes {dimension_semantics = [#tpu.dimension_semantics<parallel>], iteration_bounds = array<i64: 1>, scalar_prefetch = 0 : i64, scratch_operands = 0 : i64, tpu.core_type = #tpu.core_type<tc>, window_params = [{transform_indices = @transform_0, window_bounds = array<i64: 320, 128>}, {pipeline_mode = #tpu.pipeline_mode<synchronous>, transform_indices = @transform_1, window_bounds = array<i64: 1, 128>}, {pipeline_mode = #tpu.pipeline_mode<synchronous>, transform_indices = @transform_2, window_bounds = array<i64: 128, 2>}, {transform_indices = @transform_3, window_bounds = array<i64: 1>}, {transform_indices = @transform_4, window_bounds = array<i64: 320, 2>}]} {
    %c0 = arith.constant 0 : index
    %c0_0 = arith.constant 0 : index
    %0 = vector.load %arg1[%c0, %c0_0] : memref<320x128xf32, #tpu.memory_space<vmem>>, vector<320x128xf32>
    %c0_1 = arith.constant 0 : index
    %c0_2 = arith.constant 0 : index
    %1 = vector.load %arg2[%c0_1, %c0_2] : memref<1x128xf32, #tpu.memory_space<vmem>>, vector<1x128xf32>
    %2 = vector.broadcast %1 : vector<1x128xf32> to vector<320x128xf32>
    %3 = arith.mulf %0, %2 : vector<320x128xf32>
    %cst = arith.constant 0.000000e+00 : f32
    %4 = vector.broadcast %cst : f32 to vector<320x128xf32>
    %5 = arith.maximumf %3, %4 : vector<320x128xf32>
    %c0_3 = arith.constant 0 : index
    %c0_4 = arith.constant 0 : index
    %6 = vector.load %arg3[%c0_3, %c0_4] : memref<128x2xf32, #tpu.memory_space<vmem>>, vector<128x2xf32>
    %cst_5 = arith.constant dense<0.000000e+00> : vector<320x2xf32>
    %7 = tpu.matmul %5, %6, %cst_5 {dimension_numbers = #tpu.dot_dimension_numbers<[1], [0], [0], [1], [0, 0, 1, 1], [], []>, precision = #tpu.contract_precision<fp32>} : vector<320x128xf32>, vector<128x2xf32>, vector<320x2xf32> -> vector<320x2xf32>
    %c0_6 = arith.constant 0 : index
    %8 = memref.load %arg4[%c0_6] : memref<1xf32, #tpu.memory_space<smem>>
    %9 = tpu.iota {dimensions = array<i32: 1>} : vector<320x2xi32>
    %c0_i32 = arith.constant 0 : i32
    %10 = vector.broadcast %c0_i32 : i32 to vector<320x2xi32>
    %11 = arith.cmpi eq, %9, %10 : vector<320x2xi32>
    %cst_7 = arith.constant 0.000000e+00 : f32
    %12 = vector.broadcast %8 : f32 to vector<320x2xf32>
    %13 = vector.broadcast %cst_7 : f32 to vector<320x2xf32>
    %14 = arith.select %11, %12, %13 : vector<320x2xi1>, vector<320x2xf32>
    %15 = arith.addf %7, %14 : vector<320x2xf32>
    %16 = arith.negf %15 : vector<320x2xf32>
    %17 = math.exp %16 : vector<320x2xf32>
    %cst_8 = arith.constant 1.000000e+00 : f32
    %18 = vector.broadcast %cst_8 : f32 to vector<320x2xf32>
    %19 = arith.addf %18, %17 : vector<320x2xf32>
    %20 = arith.divf %18, %19 : vector<320x2xf32>
    %c0_9 = arith.constant 0 : index
    %c0_10 = arith.constant 0 : index
    %21 = vector.load %arg5[%c0_9, %c0_10] : memref<320x2xf32, #tpu.memory_space<vmem>>, vector<320x2xf32>
    tpu.vector_store %arg5[%c0_9, %c0_10], %20 {strides = array<i32>} : memref<320x2xf32, #tpu.memory_space<vmem>>, vector<320x2xf32>,
    return
  }
  func.func @transform_0(%arg0: i32) -> (i32, i32) {
    %c0_i32 = arith.constant 0 : i32
    %c0_i32_0 = arith.constant 0 : i32
    return %arg0, %c0_i32 : i32, i32
  }
  func.func @transform_1(%arg0: i32) -> (i32, i32) {
    %c0_i32 = arith.constant 0 : i32
    %c0_i32_0 = arith.constant 0 : i32
    %c0_i32_1 = arith.constant 0 : i32
    return %c0_i32, %c0_i32_0 : i32, i32
  }
  func.func @transform_2(%arg0: i32) -> (i32, i32) {
    %c0_i32 = arith.constant 0 : i32
    %c0_i32_0 = arith.constant 0 : i32
    %c0_i32_1 = arith.constant 0 : i32
    return %c0_i32, %c0_i32_0 : i32, i32
  }
  func.func @transform_3(%arg0: i32) -> i32 {
    %c0_i32 = arith.constant 0 : i32
    %c0_i32_0 = arith.constant 0 : i32
    return %c0_i32 : i32
  }
  func.func @transform_4(%arg0: i32) -> (i32, i32) {
    %c0_i32 = arith.constant 0 : i32
    %c0_i32_0 = arith.constant 0 : i32
    return %arg0, %c0_i32 : i32, i32
  }
}

</mosaic_0001>

<llo_original>
// kernel: tpu_custom_call.1
$region0: #{tpu_custom_call.1}
  #allocation0 [shape = 'u32[]', space=smem, size = 0x4, offset = 0x4, fixed_abs, tag = 'smem constant byte address 0x4 - core index']
  #allocation1 [shape = 'u32[72,128]{1,0:T(1,128)}', space=vmem, size = 0x9000, scoped, tag = 'internal scratch']
  #allocation2 [shape = 'f32[1]{0:T(128)S(6)}', space=smem, size = 0x200, scoped, tag = 'scoped memory for tpu_custom_call.1']
  %s0 = inlined_call_operand.hbm [shape: f32[320,128], index: 0, kind: input, shape index: {}]
  %s1 = inlined_call_operand.vmem [shape: f32[1,128], index: 1, kind: input, shape index: {}]
  %s2 = inlined_call_operand.vmem [shape: f32[128,2], index: 2, kind: input, shape index: {}]
  %s3 = inlined_call_operand.<no memory space> [shape: f32[1], index: 3, kind: input, shape index: {}]
  %s4 = inlined_call_operand.vmem [shape: f32[320,2], index: 4, kind: output, shape index: {}]
  %s5 = sld [smem:[#allocation0]]
  $region30: #{tpu_custom_call.1} parent=0
    _
  %s7 = ssub.s32 1, %s5
  %s8 = scalar_select 0, %s7, %s5
  %9 = sst [smem:[#allocation2]] %s3
  $region1: #{tpu_custom_call.1} parent=0
    #allocation3 [shape = 'u8[163840]{0}', space=vmem, size = 0x28000, scoped, tag = 'input window, operand 0, single buffered']
    #allocation4 [shape = 's32[1]{0}', space=sflag, size = 0x4, scoped, tag = 'scoped memory for tpu_custom_call.1']
    %10 = vsyncpa [#allocation4], 0
    // Predicated region
    $region2: #{tpu_custom_call.1} parent=1 // pred_check
      _
    $region3: #{tpu_custom_call.1} parent=1 // pred_check_branch
      %12 = sbr.rel (0) target = $region5
    $region4: #{tpu_custom_call.1} parent=1 // pred_region
      %14 = vsyncadd [#allocation4], 0
      %s15 = sshll.u32 %s0, 4
      %s16 = int_to_ptr.hbm [resolvable:$true] %s15
      %s17 = sshll.u32 [#allocation3], 4
      %s18 = int_to_ptr.vmem [resolvable:$true] %s17
      %23 = dma.hbm_to_vmem [thread:$0]  %s16, 5120, %s18, [#allocation4], 128, 128, 8
    $region5: #{tpu_custom_call.1} parent=1 // pred_fallthru
      _
    // Predicated region
    $region6: #{tpu_custom_call.1} parent=1 // pred_check
      _
    $region7: #{tpu_custom_call.1} parent=1 // pred_check_branch
      %25 = sbr.rel (0) target = $region9
    $region8: #{tpu_custom_call.1} parent=1 // pred_region
      _
    $region9: #{tpu_custom_call.1} parent=1 // pred_fallthru
      _
    // Predicated region
    $region10: #{tpu_custom_call.1} parent=1 // pred_check
      _
    $region11: #{tpu_custom_call.1} parent=1 // pred_check_branch
      %27 = sbr.rel (0) target = $region13
    $region12: #{tpu_custom_call.1} parent=1 // pred_region
      _
    $region13: #{tpu_custom_call.1} parent=1 // pred_fallthru
      _
    // Predicated region
    $region14: #{tpu_custom_call.1} parent=1 // pred_check
      _
    $region15: #{tpu_custom_call.1} parent=1 // pred_check_branch
      %29 = sbr.rel (0) target = $region17
    $region16: #{tpu_custom_call.1} parent=1 // pred_region
      _
    $region17: #{tpu_custom_call.1} parent=1 // pred_fallthru
      _
    // Predicated region
    $region18: #{tpu_custom_call.1} parent=1 // pred_check
      _
    $region19: #{tpu_custom_call.1} parent=1 // pred_check_branch
      %31 = sbr.rel (0) target = $region21
    $region20: #{tpu_custom_call.1} parent=1 // pred_region
      %33 = dma.done [#allocation4], 5120
    $region21: #{tpu_custom_call.1} parent=1 // pred_fallthru
      _
    %v34 = vld [vmem:[#allocation3] sm:$0xff]
    %v35 = vld [vmem:[#allocation3 + $0x8] sm:$0xff]
    %v36 = vld [vmem:[#allocation3 + $0x10] sm:$0xff]
    %v37 = vld [vmem:[#allocation3 + $0x18] sm:$0xff]
    %v38 = vld [vmem:[#allocation3 + $0x20] sm:$0xff]
    %v39 = vld [vmem:[#allocation3 + $0x28] sm:$0xff]
    %v40 = vld [vmem:[#allocation3 + $0x30] sm:$0xff]
    %v41 = vld [vmem:[#allocation3 + $0x38] sm:$0xff]
    %v42 = vld [vmem:[#allocation3 + $0x40] sm:$0xff]
    %v43 = vld [vmem:[#allocation3 + $0x48] sm:$0xff]
    %v44 = vld [vmem:[#allocation3 + $0x50] sm:$0xff]
    %v45 = vld [vmem:[#allocation3 + $0x58] sm:$0xff]
    %v46 = vld [vmem:[#allocation3 + $0x60] sm:$0xff]
    %v47 = vld [vmem:[#allocation3 + $0x68] sm:$0xff]
    %v48 = vld [vmem:[#allocation3 + $0x70] sm:$0xff]
    %v49 = vld [vmem:[#allocation3 + $0x78] sm:$0xff]
    %v50 = vld [vmem:[#allocation3 + $0x80] sm:$0xff]
    %v51 = vld [vmem:[#allocation3 + $0x88] sm:$0xff]
    %v52 = vld [vmem:[#allocation3 + $0x90] sm:$0xff]
    %v53 = vld [vmem:[#allocation3 + $0x98] sm:$0xff]
    %v54 = vld [vmem:[#allocation3 + $0xa0] sm:$0xff]
    %v55 = vld [vmem:[#allocation3 + $0xa8] sm:$0xff]
    %v56 = vld [vmem:[#allocation3 + $0xb0] sm:$0xff]
    %v57 = vld [vmem:[#allocation3 + $0xb8] sm:$0xff]
    %v58 = vld [vmem:[#allocation3 + $0xc0] sm:$0xff]
    %v59 = vld [vmem:[#allocation3 + $0xc8] sm:$0xff]
    %v60 = vld [vmem:[#allocation3 + $0xd0] sm:$0xff]
    %v61 = vld [vmem:[#allocation3 + $0xd8] sm:$0xff]
    %v62 = vld [vmem:[#allocation3 + $0xe0] sm:$0xff]
    %v63 = vld [vmem:[#allocation3 + $0xe8] sm:$0xff]
    %v64 = vld [vmem:[#allocation3 + $0xf0] sm:$0xff]
    %v65 = vld [vmem:[#allocation3 + $0xf8] sm:$0xff]
    %v66 = vld [vmem:[#allocation3 + $0x100] sm:$0xff]
    %v67 = vld [vmem:[#allocation3 + $0x108] sm:$0xff]
    %v68 = vld [vmem:[#allocation3 + $0x110] sm:$0xff]
    %v69 = vld [vmem:[#allocation3 + $0x118] sm:$0xff]
    %v70 = vld [vmem:[#allocation3 + $0x120] sm:$0xff]
    %v71 = vld [vmem:[#allocation3 + $0x128] sm:$0xff]
    %v72 = vld [vmem:[#allocation3 + $0x130] sm:$0xff]
    %v73 = vld [vmem:[#allocation3 + $0x138] sm:$0xff]
    %v74 = vld [vmem:[%s1] sm:$0x1]
    %v76 = vperm.slane %v74, 0
    %v78 = vmul.f32 %v34, %v76
    %v79 = vmul.f32 %v35, %v76
    %v80 = vmul.f32 %v36, %v76
    %v81 = vmul.f32 %v37, %v76
    %v82 = vmul.f32 %v38, %v76
    %v83 = vmul.f32 %v39, %v76
    %v84 = vmul.f32 %v40, %v76
    %v85 = vmul.f32 %v41, %v76
    %v86 = vmul.f32 %v42, %v76
    %v87 = vmul.f32 %v43, %v76
    %v88 = vmul.f32 %v44, %v76
    %v89 = vmul.f32 %v45, %v76
    %v90 = vmul.f32 %v46, %v76
    %v91 = vmul.f32 %v47, %v76
    %v92 = vmul.f32 %v48, %v76
    %v93 = vmul.f32 %v49, %v76
    %v94 = vmul.f32 %v50, %v76
    %v95 = vmul.f32 %v51, %v76
    %v96 = vmul.f32 %v52, %v76
    %v97 = vmul.f32 %v53, %v76
    %v98 = vmul.f32 %v54, %v76
    %v99 = vmul.f32 %v55, %v76
    %v100 = vmul.f32 %v56, %v76
    %v101 = vmul.f32 %v57, %v76
    %v102 = vmul.f32 %v58, %v76
    %v103 = vmul.f32 %v59, %v76
    %v104 = vmul.f32 %v60, %v76
    %v105 = vmul.f32 %v61, %v76
    %v106 = vmul.f32 %v62, %v76
    %v107 = vmul.f32 %v63, %v76
    %v108 = vmul.f32 %v64, %v76
    %v109 = vmul.f32 %v65, %v76
    %v110 = vmul.f32 %v66, %v76
    %v111 = vmul.f32 %v67, %v76
    %v112 = vmul.f32 %v68, %v76
    %v113 = vmul.f32 %v69, %v76
    %v114 = vmul.f32 %v70, %v76
    %v115 = vmul.f32 %v71, %v76
    %v116 = vmul.f32 %v72, %v76
    %v117 = vmul.f32 %v73, %v76
    %v118 = vmax.f32 %v78, 0.0
    %v119 = vmax.f32 %v79, 0.0
    %v120 = vmax.f32 %v80, 0.0
    %v121 = vmax.f32 %v81, 0.0
    %v122 = vmax.f32 %v82, 0.0
    %v123 = vmax.f32 %v83, 0.0
    %v124 = vmax.f32 %v84, 0.0
    %v125 = vmax.f32 %v85, 0.0
    %v126 = vmax.f32 %v86, 0.0
    %v127 = vmax.f32 %v87, 0.0
    %v128 = vmax.f32 %v88, 0.0
    %v129 = vmax.f32 %v89, 0.0
    %v130 = vmax.f32 %v90, 0.0
    %v131 = vmax.f32 %v91, 0.0
    %v132 = vmax.f32 %v92, 0.0
    %v133 = vmax.f32 %v93, 0.0
    %v134 = vmax.f32 %v94, 0.0
    %v135 = vmax.f32 %v95, 0.0
    %v136 = vmax.f32 %v96, 0.0
    %v137 = vmax.f32 %v97, 0.0
    %v138 = vmax.f32 %v98, 0.0
    %v139 = vmax.f32 %v99, 0.0
    %v140 = vmax.f32 %v100, 0.0
    %v141 = vmax.f32 %v101, 0.0
    %v142 = vmax.f32 %v102, 0.0
    %v143 = vmax.f32 %v103, 0.0
    %v144 = vmax.f32 %v104, 0.0
    %v145 = vmax.f32 %v105, 0.0
    %v146 = vmax.f32 %v106, 0.0
    %v147 = vmax.f32 %v107, 0.0
    %v148 = vmax.f32 %v108, 0.0
    %v149 = vmax.f32 %v109, 0.0
    %v150 = vmax.f32 %v110, 0.0
    %v151 = vmax.f32 %v111, 0.0
    %v152 = vmax.f32 %v112, 0.0
    %v153 = vmax.f32 %v113, 0.0
    %v154 = vmax.f32 %v114, 0.0
    %v155 = vmax.f32 %v115, 0.0
    %v156 = vmax.f32 %v116, 0.0
    %v157 = vmax.f32 %v117, 0.0
    %v158 = vld [vmem:[%s2] sm:$0xff]
    %v159 = vld [vmem:[%s2 + $0x8] sm:$0xff]
    %v160 = vld [vmem:[%s2 + $0x10] sm:$0xff]
    %v161 = vld [vmem:[%s2 + $0x18] sm:$0xff]
    %v162 = vld [vmem:[%s2 + $0x20] sm:$0xff]
    %v163 = vld [vmem:[%s2 + $0x28] sm:$0xff]
    %v164 = vld [vmem:[%s2 + $0x30] sm:$0xff]
    %v165 = vld [vmem:[%s2 + $0x38] sm:$0xff]
    %v166 = vld [vmem:[%s2 + $0x40] sm:$0xff]
    %v167 = vld [vmem:[%s2 + $0x48] sm:$0xff]
    %v168 = vld [vmem:[%s2 + $0x50] sm:$0xff]
    %v169 = vld [vmem:[%s2 + $0x58] sm:$0xff]
    %v170 = vld [vmem:[%s2 + $0x60] sm:$0xff]
    %v171 = vld [vmem:[%s2 + $0x68] sm:$0xff]
    %v172 = vld [vmem:[%s2 + $0x70] sm:$0xff]
    %v173 = vld [vmem:[%s2 + $0x78] sm:$0xff]
    %s174 = sld [smem:[#allocation2]]
    %v175 = vlaneseq
    %v176 = vand.u32 %v175, 127
    %vm177 = vcmp.eq.s32.totalorder %v176, 0
    %v178 = vstv %s174
    %v179 = vsel %vm177, %v178, 0.0
    %v180 = vand.u32 %v173, 4294901760
    %181 = vmatpush.msra.mxu0 %v180
    %v182 = vand.u32 %v172, 4294901760
    %183 = vmatpush.msra.mxu0 %v182
    %v184 = vand.u32 %v171, 4294901760
    %185 = vmatpush.msra.mxu0 %v184
    %v186 = vand.u32 %v170, 4294901760
    %187 = vmatpush.msra.mxu0 %v186
    %v188 = vand.u32 %v169, 4294901760
    %189 = vmatpush.msra.mxu0 %v188
    %v190 = vand.u32 %v168, 4294901760
    %191 = vmatpush.msra.mxu0 %v190
    %v192 = vand.u32 %v167, 4294901760
    %193 = vmatpush.msra.mxu0 %v192
    %v194 = vand.u32 %v166, 4294901760
    %195 = vmatpush.msra.mxu0 %v194
    %v196 = vand.u32 %v165, 4294901760
    %197 = vmatpush.msra.mxu0 %v196
    %v198 = vand.u32 %v164, 4294901760
    %199 = vmatpush.msra.mxu0 %v198
    %v200 = vand.u32 %v163, 4294901760
    %201 = vmatpush.msra.mxu0 %v200
    %v202 = vand.u32 %v162, 4294901760
    %203 = vmatpush.msra.mxu0 %v202
    %v204 = vand.u32 %v161, 4294901760
    %205 = vmatpush.msra.mxu0 %v204
    %v206 = vand.u32 %v160, 4294901760
    %207 = vmatpush.msra.mxu0 %v206
    %v208 = vand.u32 %v159, 4294901760
    %209 = vmatpush.msra.mxu0 %v208
    %v210 = vand.u32 %v158, 4294901760
    %211 = vmatpush.msra.mxu0 %v210
    %v212 = vand.u32 %v118, 4294901760
    %v213 = vsub.f32 %v118, %v212
    %v214 = vand.u32 %v213, 4294901760
    %v215 = vsub.f32 %v213, %v214
    %v216 = vand.u32 %v215, 4294901760
    %217 = vmatmul.f32.gmra.mxu0 %v216
    %v218 = vpop.f32.mrf.mxu0
    %v219 = vadd.f32 %v179, %v218
    %v220 = vand.u32 %v119, 4294901760
    %v221 = vsub.f32 %v119, %v220
    %v222 = vand.u32 %v221, 4294901760
    %v223 = vsub.f32 %v221, %v222
    %v224 = vand.u32 %v223, 4294901760
    %225 = vmatmul.f32.gmra.mxu0 %v224
    %v226 = vpop.f32.mrf.mxu0
    %v227 = vadd.f32 %v179, %v226
    %v228 = vand.u32 %v120, 4294901760
    %v229 = vsub.f32 %v120, %v228
    %v230 = vand.u32 %v229, 4294901760
    %v231 = vsub.f32 %v229, %v230
    %v232 = vand.u32 %v231, 4294901760
    %233 = vmatmul.f32.gmra.mxu0 %v232
    %v234 = vpop.f32.mrf.mxu0
    %v235 = vadd.f32 %v179, %v234
    %v236 = vand.u32 %v121, 4294901760
    %v237 = vsub.f32 %v121, %v236
    %v238 = vand.u32 %v237, 4294901760
    %v239 = vsub.f32 %v237, %v238
    %v240 = vand.u32 %v239, 4294901760
    %241 = vmatmul.f32.gmra.mxu0 %v240
    %v242 = vpop.f32.mrf.mxu0
    %v243 = vadd.f32 %v179, %v242
    %v244 = vand.u32 %v122, 4294901760
    %v245 = vsub.f32 %v122, %v244
    %v246 = vand.u32 %v245, 4294901760
    %v247 = vsub.f32 %v245, %v246
    %v248 = vand.u32 %v247, 4294901760
    %249 = vmatmul.f32.gmra.mxu0 %v248
    %v250 = vpop.f32.mrf.mxu0
    %v251 = vadd.f32 %v179, %v250
    %v252 = vand.u32 %v123, 4294901760
    %v253 = vsub.f32 %v123, %v252
    %v254 = vand.u32 %v253, 4294901760
    %v255 = vsub.f32 %v253, %v254
    %v256 = vand.u32 %v255, 4294901760
    %257 = vmatmul.f32.gmra.mxu0 %v256
    %v258 = vpop.f32.mrf.mxu0
    %v259 = vadd.f32 %v179, %v258
    %v260 = vand.u32 %v124, 4294901760
    %v261 = vsub.f32 %v124, %v260
    %v262 = vand.u32 %v261, 4294901760
    %v263 = vsub.f32 %v261, %v262
    %v264 = vand.u32 %v263, 4294901760
    %265 = vmatmul.f32.gmra.mxu0 %v264
    %v266 = vpop.f32.mrf.mxu0
    %v267 = vadd.f32 %v179, %v266
    %v268 = vand.u32 %v125, 4294901760
    %v269 = vsub.f32 %v125, %v268
    %v270 = vand.u32 %v269, 4294901760
    %v271 = vsub.f32 %v269, %v270
    %v272 = vand.u32 %v271, 4294901760
    %273 = vmatmul.f32.gmra.mxu0 %v272
    %v274 = vpop.f32.mrf.mxu0
    %v275 = vadd.f32 %v179, %v274
    %v276 = vand.u32 %v126, 4294901760
    %v277 = vsub.f32 %v126, %v276
    %v278 = vand.u32 %v277, 4294901760
    %v279 = vsub.f32 %v277, %v278
    %v280 = vand.u32 %v279, 4294901760
    %281 = vmatmul.f32.gmra.mxu0 %v280
    %v282 = vpop.f32.mrf.mxu0
    %v283 = vadd.f32 %v179, %v282
    %v284 = vand.u32 %v127, 4294901760
    %v285 = vsub.f32 %v127, %v284
    %v286 = vand.u32 %v285, 4294901760
    %v287 = vsub.f32 %v285, %v286
    %v288 = vand.u32 %v287, 4294901760
    %289 = vmatmul.f32.gmra.mxu0 %v288
    %v290 = vpop.f32.mrf.mxu0
    %v291 = vadd.f32 %v179, %v290
    %v292 = vand.u32 %v128, 4294901760
    %v293 = vsub.f32 %v128, %v292
    %v294 = vand.u32 %v293, 4294901760
    %v295 = vsub.f32 %v293, %v294
    %v296 = vand.u32 %v295, 4294901760
    %297 = vmatmul.f32.gmra.mxu0 %v296
    %v298 = vpop.f32.mrf.mxu0
    %v299 = vadd.f32 %v179, %v298
    %v300 = vand.u32 %v129, 4294901760
    %v301 = vsub.f32 %v129, %v300
    %v302 = vand.u32 %v301, 4294901760
    %v303 = vsub.f32 %v301, %v302
    %v304 = vand.u32 %v303, 4294901760
    %305 = vmatmul.f32.gmra.mxu0 %v304
    %v306 = vpop.f32.mrf.mxu0
    %v307 = vadd.f32 %v179, %v306
    %v308 = vand.u32 %v130, 4294901760
    %v309 = vsub.f32 %v130, %v308
    %v310 = vand.u32 %v309, 4294901760
    %v311 = vsub.f32 %v309, %v310
    %v312 = vand.u32 %v311, 4294901760
    %313 = vmatmul.f32.gmra.mxu0 %v312
    %v314 = vpop.f32.mrf.mxu0
    %v315 = vadd.f32 %v179, %v314
    %v316 = vand.u32 %v131, 4294901760
    %v317 = vsub.f32 %v131, %v316
    %v318 = vand.u32 %v317, 4294901760
    %v319 = vsub.f32 %v317, %v318
    %v320 = vand.u32 %v319, 4294901760
    %321 = vmatmul.f32.gmra.mxu0 %v320
    %v322 = vpop.f32.mrf.mxu0
    %v323 = vadd.f32 %v179, %v322
    %v324 = vand.u32 %v132, 4294901760
    %v325 = vsub.f32 %v132, %v324
    %v326 = vand.u32 %v325, 4294901760
    %v327 = vsub.f32 %v325, %v326
    %v328 = vand.u32 %v327, 4294901760
    %329 = vmatmul.f32.gmra.mxu0 %v328
    %v330 = vpop.f32.mrf.mxu0
    %v331 = vadd.f32 %v179, %v330
    %v332 = vand.u32 %v133, 4294901760
    %v333 = vsub.f32 %v133, %v332
    %v334 = vand.u32 %v333, 4294901760
    %v335 = vsub.f32 %v333, %v334
    %v336 = vand.u32 %v335, 4294901760
    %337 = vmatmul.f32.gmra.mxu0 %v336
    %v338 = vpop.f32.mrf.mxu0
    %v339 = vadd.f32 %v179, %v338
    %v340 = vand.u32 %v134, 4294901760
    %v341 = vsub.f32 %v134, %v340
    %v342 = vand.u32 %v341, 4294901760
    %v343 = vsub.f32 %v341, %v342
    %v344 = vand.u32 %v343, 4294901760
    %345 = vmatmul.f32.gmra.mxu0 %v344
    %v346 = vpop.f32.mrf.mxu0
    %v347 = vadd.f32 %v179, %v346
    %v348 = vand.u32 %v135, 4294901760
    %v349 = vsub.f32 %v135, %v348
    %v350 = vand.u32 %v349, 4294901760
    %v351 = vsub.f32 %v349, %v350
    %v352 = vand.u32 %v351, 4294901760
    %353 = vmatmul.f32.gmra.mxu0 %v352
    %v354 = vpop.f32.mrf.mxu0
    %v355 = vadd.f32 %v179, %v354
    %v356 = vand.u32 %v136, 4294901760
    %v357 = vsub.f32 %v136, %v356
    %v358 = vand.u32 %v357, 4294901760
    %v359 = vsub.f32 %v357, %v358
    %v360 = vand.u32 %v359, 4294901760
    %361 = vmatmul.f32.gmra.mxu0 %v360
    %v362 = vpop.f32.mrf.mxu0
    %v363 = vadd.f32 %v179, %v362
    %v364 = vand.u32 %v137, 4294901760
    %v365 = vsub.f32 %v137, %v364
    %v366 = vand.u32 %v365, 4294901760
    %v367 = vsub.f32 %v365, %v366
    %v368 = vand.u32 %v367, 4294901760
    %369 = vmatmul.f32.gmra.mxu0 %v368
    %v370 = vpop.f32.mrf.mxu0
    %v371 = vadd.f32 %v179, %v370
    %v372 = vand.u32 %v138, 4294901760
    %v373 = vsub.f32 %v138, %v372
    %v374 = vand.u32 %v373, 4294901760
    %v375 = vsub.f32 %v373, %v374
    %v376 = vand.u32 %v375, 4294901760
    %377 = vmatmul.f32.gmra.mxu0 %v376
    %v378 = vpop.f32.mrf.mxu0
    %v379 = vadd.f32 %v179, %v378
    %v380 = vand.u32 %v139, 4294901760
    %v381 = vsub.f32 %v139, %v380
    %v382 = vand.u32 %v381, 4294901760
    %v383 = vsub.f32 %v381, %v382
    %v384 = vand.u32 %v383, 4294901760
    %385 = vmatmul.f32.gmra.mxu0 %v384
    %v386 = vpop.f32.mrf.mxu0
    %v387 = vadd.f32 %v179, %v386
    %v388 = vand.u32 %v140, 4294901760
    %v389 = vsub.f32 %v140, %v388
    %v390 = vand.u32 %v389, 4294901760
    %v391 = vsub.f32 %v389, %v390
    %v392 = vand.u32 %v391, 4294901760
    %393 = vmatmul.f32.gmra.mxu0 %v392
    %v394 = vpop.f32.mrf.mxu0
    %v395 = vadd.f32 %v179, %v394
    %v396 = vand.u32 %v141, 4294901760
    %v397 = vsub.f32 %v141, %v396
    %v398 = vand.u32 %v397, 4294901760
    %v399 = vsub.f32 %v397, %v398
    %v400 = vand.u32 %v399, 4294901760
    %401 = vmatmul.f32.gmra.mxu0 %v400
    %v402 = vpop.f32.mrf.mxu0
    %v403 = vadd.f32 %v179, %v402
    %v404 = vand.u32 %v142, 4294901760
    %v405 = vsub.f32 %v142, %v404
    %v406 = vand.u32 %v405, 4294901760
    %v407 = vsub.f32 %v405, %v406
    %v408 = vand.u32 %v407, 4294901760
    %409 = vmatmul.f32.gmra.mxu0 %v408
    %v410 = vpop.f32.mrf.mxu0
    %v411 = vadd.f32 %v179, %v410
    %v412 = vand.u32 %v143, 4294901760
    %v413 = vsub.f32 %v143, %v412
    %v414 = vand.u32 %v413, 4294901760
    %v415 = vsub.f32 %v413, %v414
    %v416 = vand.u32 %v415, 4294901760
    %417 = vmatmul.f32.gmra.mxu0 %v416
    %v418 = vpop.f32.mrf.mxu0
    %v419 = vadd.f32 %v179, %v418
    %v420 = vand.u32 %v144, 4294901760
    %v421 = vsub.f32 %v144, %v420
    %v422 = vand.u32 %v421, 4294901760
    %v423 = vsub.f32 %v421, %v422
    %v424 = vand.u32 %v423, 4294901760
    %425 = vmatmul.f32.gmra.mxu0 %v424
    %v426 = vpop.f32.mrf.mxu0
    %v427 = vadd.f32 %v179, %v426
    %v428 = vand.u32 %v145, 4294901760
    %v429 = vsub.f32 %v145, %v428
    %v430 = vand.u32 %v429, 4294901760
    %v431 = vsub.f32 %v429, %v430
    %v432 = vand.u32 %v431, 4294901760
    %433 = vmatmul.f32.gmra.mxu0 %v432
    %v434 = vpop.f32.mrf.mxu0
    %v435 = vadd.f32 %v179, %v434
    %v436 = vand.u32 %v146, 4294901760
    %v437 = vsub.f32 %v146, %v436
    %v438 = vand.u32 %v437, 4294901760
    %v439 = vsub.f32 %v437, %v438
    %v440 = vand.u32 %v439, 4294901760
    %441 = vmatmul.f32.gmra.mxu0 %v440
    %v442 = vpop.f32.mrf.mxu0
    %v443 = vadd.f32 %v179, %v442
    %v444 = vand.u32 %v147, 4294901760
    %v445 = vsub.f32 %v147, %v444
    %v446 = vand.u32 %v445, 4294901760
    %v447 = vsub.f32 %v445, %v446
    %v448 = vand.u32 %v447, 4294901760
    %449 = vmatmul.f32.gmra.mxu0 %v448
    %v450 = vpop.f32.mrf.mxu0
    %v451 = vadd.f32 %v179, %v450
    %v452 = vand.u32 %v148, 4294901760
    %v453 = vsub.f32 %v148, %v452
    %v454 = vand.u32 %v453, 4294901760
    %v455 = vsub.f32 %v453, %v454
    %v456 = vand.u32 %v455, 4294901760
    %457 = vmatmul.f32.gmra.mxu0 %v456
    %v458 = vpop.f32.mrf.mxu0
    %v459 = vadd.f32 %v179, %v458
    %v460 = vand.u32 %v149, 4294901760
    %v461 = vsub.f32 %v149, %v460
    %v462 = vand.u32 %v461, 4294901760
    %v463 = vsub.f32 %v461, %v462
    %v464 = vand.u32 %v463, 4294901760
    %465 = vmatmul.f32.gmra.mxu0 %v464
    %v466 = vpop.f32.mrf.mxu0
    %v467 = vadd.f32 %v179, %v466
    %v468 = vand.u32 %v150, 4294901760
    %v469 = vsub.f32 %v150, %v468
    %v470 = vand.u32 %v469, 4294901760
    %v471 = vsub.f32 %v469, %v470
    %v472 = vand.u32 %v471, 4294901760
    %473 = vmatmul.f32.gmra.mxu0 %v472
    %v474 = vpop.f32.mrf.mxu0
    %v475 = vadd.f32 %v179, %v474
    %v476 = vand.u32 %v151, 4294901760
    %v477 = vsub.f32 %v151, %v476
    %v478 = vand.u32 %v477, 4294901760
    %v479 = vsub.f32 %v477, %v478
    %v480 = vand.u32 %v479, 4294901760
    %481 = vmatmul.f32.gmra.mxu0 %v480
    %v482 = vpop.f32.mrf.mxu0
    %v483 = vadd.f32 %v179, %v482
    %v484 = vand.u32 %v152, 4294901760
    %v485 = vsub.f32 %v152, %v484
    %v486 = vand.u32 %v485, 4294901760
    %v487 = vsub.f32 %v485, %v486
    %v488 = vand.u32 %v487, 4294901760
    %489 = vmatmul.f32.gmra.mxu0 %v488
    %v490 = vpop.f32.mrf.mxu0
    %v491 = vadd.f32 %v179, %v490
    %v492 = vand.u32 %v153, 4294901760
    %v493 = vsub.f32 %v153, %v492
    %v494 = vand.u32 %v493, 4294901760
    %v495 = vsub.f32 %v493, %v494
    %v496 = vand.u32 %v495, 4294901760
    %497 = vmatmul.f32.gmra.mxu0 %v496
    %v498 = vpop.f32.mrf.mxu0
    %v499 = vadd.f32 %v179, %v498
    %v500 = vand.u32 %v154, 4294901760
    %v501 = vsub.f32 %v154, %v500
    %v502 = vand.u32 %v501, 4294901760
    %v503 = vsub.f32 %v501, %v502
    %v504 = vand.u32 %v503, 4294901760
    %505 = vmatmul.f32.gmra.mxu0 %v504
    %v506 = vpop.f32.mrf.mxu0
    %v507 = vadd.f32 %v179, %v506
    %v508 = vand.u32 %v155, 4294901760
    %v509 = vsub.f32 %v155, %v508
    %v510 = vand.u32 %v509, 4294901760
    %v511 = vsub.f32 %v509, %v510
    %v512 = vand.u32 %v511, 4294901760
    %513 = vmatmul.f32.gmra.mxu0 %v512
    %v514 = vpop.f32.mrf.mxu0
    %v515 = vadd.f32 %v179, %v514
    %v516 = vand.u32 %v156, 4294901760
    %v517 = vsub.f32 %v156, %v516
    %v518 = vand.u32 %v517, 4294901760
    %v519 = vsub.f32 %v517, %v518
    %v520 = vand.u32 %v519, 4294901760
    %521 = vmatmul.f32.gmra.mxu0 %v520
    %v522 = vpop.f32.mrf.mxu0
    %v523 = vadd.f32 %v179, %v522
    %v524 = vand.u32 %v157, 4294901760
    %v525 = vsub.f32 %v157, %v524
    %v526 = vand.u32 %v525, 4294901760
    %v527 = vsub.f32 %v525, %v526
    %v528 = vand.u32 %v527, 4294901760
    %529 = vmatmul.f32.gmra.mxu0 %v528
    %v530 = vpop.f32.mrf.mxu0
    %v531 = vadd.f32 %v179, %v530
    %532 = vdwg.mxu0
    %v533 = vand.u32 %v173, 4294901760
    %v534 = vsub.f32 %v173, %v533
    %v535 = vand.u32 %v534, 4294901760
    %v536 = vsub.f32 %v534, %v535
    %v537 = vand.u32 %v536, 4294901760
    %538 = vmatpush.msra.mxu0 %v537
    %v539 = vand.u32 %v172, 4294901760
    %v540 = vsub.f32 %v172, %v539
    %v541 = vand.u32 %v540, 4294901760
    %v542 = vsub.f32 %v540, %v541
    %v543 = vand.u32 %v542, 4294901760
    %544 = vmatpush.msra.mxu0 %v543
    %v545 = vand.u32 %v171, 4294901760
    %v546 = vsub.f32 %v171, %v545
    %v547 = vand.u32 %v546, 4294901760
    %v548 = vsub.f32 %v546, %v547
    %v549 = vand.u32 %v548, 4294901760
    %550 = vmatpush.msra.mxu0 %v549
    %v551 = vand.u32 %v170, 4294901760
    %v552 = vsub.f32 %v170, %v551
    %v553 = vand.u32 %v552, 4294901760
    %v554 = vsub.f32 %v552, %v553
    %v555 = vand.u32 %v554, 4294901760
    %556 = vmatpush.msra.mxu0 %v555
    %v557 = vand.u32 %v169, 4294901760
    %v558 = vsub.f32 %v169, %v557
    %v559 = vand.u32 %v558, 4294901760
    %v560 = vsub.f32 %v558, %v559
    %v561 = vand.u32 %v560, 4294901760
    %562 = vmatpush.msra.mxu0 %v561
    %v563 = vand.u32 %v168, 4294901760
    %v564 = vsub.f32 %v168, %v563
    %v565 = vand.u32 %v564, 4294901760
    %v566 = vsub.f32 %v564, %v565
    %v567 = vand.u32 %v566, 4294901760
    %568 = vmatpush.msra.mxu0 %v567
    %v569 = vand.u32 %v167, 4294901760
    %v570 = vsub.f32 %v167, %v569
    %v571 = vand.u32 %v570, 4294901760
    %v572 = vsub.f32 %v570, %v571
    %v573 = vand.u32 %v572, 4294901760
    %574 = vmatpush.msra.mxu0 %v573
    %v575 = vand.u32 %v166, 4294901760
    %v576 = vsub.f32 %v166, %v575
    %v577 = vand.u32 %v576, 4294901760
    %v578 = vsub.f32 %v576, %v577
    %v579 = vand.u32 %v578, 4294901760
    %580 = vmatpush.msra.mxu0 %v579
    %v581 = vand.u32 %v165, 4294901760
    %v582 = vsub.f32 %v165, %v581
    %v583 = vand.u32 %v582, 4294901760
    %v584 = vsub.f32 %v582, %v583
    %v585 = vand.u32 %v584, 4294901760
    %586 = vmatpush.msra.mxu0 %v585
    %v587 = vand.u32 %v164, 4294901760
    %v588 = vsub.f32 %v164, %v587
    %v589 = vand.u32 %v588, 4294901760
    %v590 = vsub.f32 %v588, %v589
    %v591 = vand.u32 %v590, 4294901760
    %592 = vmatpush.msra.mxu0 %v591
    %v593 = vand.u32 %v163, 4294901760
    %v594 = vsub.f32 %v163, %v593
    %v595 = vand.u32 %v594, 4294901760
    %v596 = vsub.f32 %v594, %v595
    %v597 = vand.u32 %v596, 4294901760
    %598 = vmatpush.msra.mxu0 %v597
    %v599 = vand.u32 %v162, 4294901760
    %v600 = vsub.f32 %v162, %v599
    %v601 = vand.u32 %v600, 4294901760
    %v602 = vsub.f32 %v600, %v601
    %v603 = vand.u32 %v602, 4294901760
    %604 = vmatpush.msra.mxu0 %v603
    %v605 = vand.u32 %v161, 4294901760
    %v606 = vsub.f32 %v161, %v605
    %v607 = vand.u32 %v606, 4294901760
    %v608 = vsub.f32 %v606, %v607
    %v609 = vand.u32 %v608, 4294901760
    %610 = vmatpush.msra.mxu0 %v609
    %v611 = vand.u32 %v160, 4294901760
    %v612 = vsub.f32 %v160, %v611
    %v613 = vand.u32 %v612, 4294901760
    %v614 = vsub.f32 %v612, %v613
    %v615 = vand.u32 %v614, 4294901760
    %616 = vmatpush.msra.mxu0 %v615
    %v617 = vand.u32 %v159, 4294901760
    %v618 = vsub.f32 %v159, %v617
    %v619 = vand.u32 %v618, 4294901760
    %v620 = vsub.f32 %v618, %v619
    %v621 = vand.u32 %v620, 4294901760
    %622 = vmatpush.msra.mxu0 %v621
    %v623 = vand.u32 %v158, 4294901760
    %v624 = vsub.f32 %v158, %v623
    %v625 = vand.u32 %v624, 4294901760
    %v626 = vsub.f32 %v624, %v625
    %v627 = vand.u32 %v626, 4294901760
    %628 = vmatpush.msra.mxu0 %v627
    %v629 = vand.u32 %v118, 4294901760
    %630 = vmatmul.f32.gmra.mxu0 %v629
    %v631 = vpop.f32.mrf.mxu0
    %v632 = vadd.f32 %v219, %v631
    %v633 = vand.u32 %v119, 4294901760
    %634 = vmatmul.f32.gmra.mxu0 %v633
    %v635 = vpop.f32.mrf.mxu0
    %v636 = vadd.f32 %v227, %v635
    %v637 = vand.u32 %v120, 4294901760
    %638 = vmatmul.f32.gmra.mxu0 %v637
    %v639 = vpop.f32.mrf.mxu0
    %v640 = vadd.f32 %v235, %v639
    %v641 = vand.u32 %v121, 4294901760
    %642 = vmatmul.f32.gmra.mxu0 %v641
    %v643 = vpop.f32.mrf.mxu0
    %v644 = vadd.f32 %v243, %v643
    %v645 = vand.u32 %v122, 4294901760
    %646 = vmatmul.f32.gmra.mxu0 %v645
    %v647 = vpop.f32.mrf.mxu0
    %v648 = vadd.f32 %v251, %v647
    %v649 = vand.u32 %v123, 4294901760
    %650 = vmatmul.f32.gmra.mxu0 %v649
    %v651 = vpop.f32.mrf.mxu0
    %v652 = vadd.f32 %v259, %v651
    %v653 = vand.u32 %v124, 4294901760
    %654 = vmatmul.f32.gmra.mxu0 %v653
    %v655 = vpop.f32.mrf.mxu0
    %v656 = vadd.f32 %v267, %v655
    %v657 = vand.u32 %v125, 4294901760
    %658 = vmatmul.f32.gmra.mxu0 %v657
    %v659 = vpop.f32.mrf.mxu0
    %v660 = vadd.f32 %v275, %v659
    %v661 = vand.u32 %v126, 4294901760
    %662 = vmatmul.f32.gmra.mxu0 %v661
    %v663 = vpop.f32.mrf.mxu0
    %v664 = vadd.f32 %v283, %v663
    %v665 = vand.u32 %v127, 4294901760
    %666 = vmatmul.f32.gmra.mxu0 %v665
    %v667 = vpop.f32.mrf.mxu0
    %v668 = vadd.f32 %v291, %v667
    %v669 = vand.u32 %v128, 4294901760
    %670 = vmatmul.f32.gmra.mxu0 %v669
    %v671 = vpop.f32.mrf.mxu0
    %v672 = vadd.f32 %v299, %v671
    %v673 = vand.u32 %v129, 4294901760
    %674 = vmatmul.f32.gmra.mxu0 %v673
    %v675 = vpop.f32.mrf.mxu0
    %v676 = vadd.f32 %v307, %v675
    %v677 = vand.u32 %v130, 4294901760
    %678 = vmatmul.f32.gmra.mxu0 %v677
    %v679 = vpop.f32.mrf.mxu0
    %v680 = vadd.f32 %v315, %v679
    %v681 = vand.u32 %v131, 4294901760
    %682 = vmatmul.f32.gmra.mxu0 %v681
    %v683 = vpop.f32.mrf.mxu0
    %v684 = vadd.f32 %v323, %v683
    %v685 = vand.u32 %v132, 4294901760
    %686 = vmatmul.f32.gmra.mxu0 %v685
    %v687 = vpop.f32.mrf.mxu0
    %v688 = vadd.f32 %v331, %v687
    %v689 = vand.u32 %v133, 4294901760
    %690 = vmatmul.f32.gmra.mxu0 %v689
    %v691 = vpop.f32.mrf.mxu0
    %v692 = vadd.f32 %v339, %v691
    %v693 = vand.u32 %v134, 4294901760
    %694 = vmatmul.f32.gmra.mxu0 %v693
    %v695 = vpop.f32.mrf.mxu0
    %v696 = vadd.f32 %v347, %v695
    %v697 = vand.u32 %v135, 4294901760
    %698 = vmatmul.f32.gmra.mxu0 %v697
    %v699 = vpop.f32.mrf.mxu0
    %v700 = vadd.f32 %v355, %v699
    %v701 = vand.u32 %v136, 4294901760
    %702 = vmatmul.f32.gmra.mxu0 %v701
    %v703 = vpop.f32.mrf.mxu0
    %v704 = vadd.f32 %v363, %v703
    %v705 = vand.u32 %v137, 4294901760
    %706 = vmatmul.f32.gmra.mxu0 %v705
    %v707 = vpop.f32.mrf.mxu0
    %v708 = vadd.f32 %v371, %v707
    %v709 = vand.u32 %v138, 4294901760
    %710 = vmatmul.f32.gmra.mxu0 %v709
    %v711 = vpop.f32.mrf.mxu0
    %v712 = vadd.f32 %v379, %v711
    %v713 = vand.u32 %v139, 4294901760
    %714 = vmatmul.f32.gmra.mxu0 %v713
    %v715 = vpop.f32.mrf.mxu0
    %v716 = vadd.f32 %v387, %v715
    %v717 = vand.u32 %v140, 4294901760
    %718 = vmatmul.f32.gmra.mxu0 %v717
    %v719 = vpop.f32.mrf.mxu0
    %v720 = vadd.f32 %v395, %v719
    %v721 = vand.u32 %v141, 4294901760
    %722 = vmatmul.f32.gmra.mxu0 %v721
    %v723 = vpop.f32.mrf.mxu0
    %v724 = vadd.f32 %v403, %v723
    %v725 = vand.u32 %v142, 4294901760
    %726 = vmatmul.f32.gmra.mxu0 %v725
    %v727 = vpop.f32.mrf.mxu0
    %v728 = vadd.f32 %v411, %v727
    %v729 = vand.u32 %v143, 4294901760
    %730 = vmatmul.f32.gmra.mxu0 %v729
    %v731 = vpop.f32.mrf.mxu0
    %v732 = vadd.f32 %v419, %v731
    %v733 = vand.u32 %v144, 4294901760
    %734 = vmatmul.f32.gmra.mxu0 %v733
    %v735 = vpop.f32.mrf.mxu0
    %v736 = vadd.f32 %v427, %v735
    %v737 = vand.u32 %v145, 4294901760
    %738 = vmatmul.f32.gmra.mxu0 %v737
    %v739 = vpop.f32.mrf.mxu0
    %v740 = vadd.f32 %v435, %v739
    %v741 = vand.u32 %v146, 4294901760
    %742 = vmatmul.f32.gmra.mxu0 %v741
    %v743 = vpop.f32.mrf.mxu0
    %v744 = vadd.f32 %v443, %v743
    %v745 = vand.u32 %v147, 4294901760
    %746 = vmatmul.f32.gmra.mxu0 %v745
    %v747 = vpop.f32.mrf.mxu0
    %v748 = vadd.f32 %v451, %v747
    %v749 = vand.u32 %v148, 4294901760
    %750 = vmatmul.f32.gmra.mxu0 %v749
    %v751 = vpop.f32.mrf.mxu0
    %v752 = vadd.f32 %v459, %v751
    %v753 = vand.u32 %v149, 4294901760
    %754 = vmatmul.f32.gmra.mxu0 %v753
    %v755 = vpop.f32.mrf.mxu0
    %v756 = vadd.f32 %v467, %v755
    %v757 = vand.u32 %v150, 4294901760
    %758 = vmatmul.f32.gmra.mxu0 %v757
    %v759 = vpop.f32.mrf.mxu0
    %v760 = vadd.f32 %v475, %v759
    %v761 = vand.u32 %v151, 4294901760
    %762 = vmatmul.f32.gmra.mxu0 %v761
    %v763 = vpop.f32.mrf.mxu0
    %v764 = vadd.f32 %v483, %v763
    %v765 = vand.u32 %v152, 4294901760
    %766 = vmatmul.f32.gmra.mxu0 %v765
    %v767 = vpop.f32.mrf.mxu0
    %v768 = vadd.f32 %v491, %v767
    %v769 = vand.u32 %v153, 4294901760
    %770 = vmatmul.f32.gmra.mxu0 %v769
    %v771 = vpop.f32.mrf.mxu0
    %v772 = vadd.f32 %v499, %v771
    %v773 = vand.u32 %v154, 4294901760
    %774 = vmatmul.f32.gmra.mxu0 %v773
    %v775 = vpop.f32.mrf.mxu0
    %v776 = vadd.f32 %v507, %v775
    %v777 = vand.u32 %v155, 4294901760
    %778 = vmatmul.f32.gmra.mxu0 %v777
    %v779 = vpop.f32.mrf.mxu0
    %v780 = vadd.f32 %v515, %v779
    %v781 = vand.u32 %v156, 4294901760
    %782 = vmatmul.f32.gmra.mxu0 %v781
    %v783 = vpop.f32.mrf.mxu0
    %v784 = vadd.f32 %v523, %v783
    %v785 = vand.u32 %v157, 4294901760
    %786 = vmatmul.f32.gmra.mxu0 %v785
    %v787 = vpop.f32.mrf.mxu0
    %v788 = vadd.f32 %v531, %v787
    %789 = vdwg.mxu0
    %v790 = vand.u32 %v173, 4294901760
    %v791 = vsub.f32 %v173, %v790
    %792 = vmatpush.msra.mxu0 %v791
    %v793 = vand.u32 %v172, 4294901760
    %v794 = vsub.f32 %v172, %v793
    %795 = vmatpush.msra.mxu0 %v794
    %v796 = vand.u32 %v171, 4294901760
    %v797 = vsub.f32 %v171, %v796
    %798 = vmatpush.msra.mxu0 %v797
    %v799 = vand.u32 %v170, 4294901760
    %v800 = vsub.f32 %v170, %v799
    %801 = vmatpush.msra.mxu0 %v800
    %v802 = vand.u32 %v169, 4294901760
    %v803 = vsub.f32 %v169, %v802
    %804 = vmatpush.msra.mxu0 %v803
    %v805 = vand.u32 %v168, 4294901760
    %v806 = vsub.f32 %v168, %v805
    %807 = vmatpush.msra.mxu0 %v806
    %v808 = vand.u32 %v167, 4294901760
    %v809 = vsub.f32 %v167, %v808
    %810 = vmatpush.msra.mxu0 %v809
    %v811 = vand.u32 %v166, 4294901760
    %v812 = vsub.f32 %v166, %v811
    %813 = vmatpush.msra.mxu0 %v812
    %v814 = vand.u32 %v165, 4294901760
    %v815 = vsub.f32 %v165, %v814
    %816 = vmatpush.msra.mxu0 %v815
    %v817 = vand.u32 %v164, 4294901760
    %v818 = vsub.f32 %v164, %v817
    %819 = vmatpush.msra.mxu0 %v818
    %v820 = vand.u32 %v163, 4294901760
    %v821 = vsub.f32 %v163, %v820
    %822 = vmatpush.msra.mxu0 %v821
    %v823 = vand.u32 %v162, 4294901760
    %v824 = vsub.f32 %v162, %v823
    %825 = vmatpush.msra.mxu0 %v824
    %v826 = vand.u32 %v161, 4294901760
    %v827 = vsub.f32 %v161, %v826
    %828 = vmatpush.msra.mxu0 %v827
    %v829 = vand.u32 %v160, 4294901760
    %v830 = vsub.f32 %v160, %v829
    %831 = vmatpush.msra.mxu0 %v830
    %v832 = vand.u32 %v159, 4294901760
    %v833 = vsub.f32 %v159, %v832
    %834 = vmatpush.msra.mxu0 %v833
    %v835 = vand.u32 %v158, 4294901760
    %v836 = vsub.f32 %v158, %v835
    %837 = vmatpush.msra.mxu0 %v836
    %v838 = vand.u32 %v118, 4294901760
    %v839 = vsub.f32 %v118, %v838
    %840 = vmatmul.f32.gmra.mxu0 %v839
    %v841 = vpop.f32.mrf.mxu0
    %v842 = vadd.f32 %v632, %v841
    %v843 = vand.u32 %v119, 4294901760
    %v844 = vsub.f32 %v119, %v843
    %845 = vmatmul.f32.gmra.mxu0 %v844
    %v846 = vpop.f32.mrf.mxu0
    %v847 = vadd.f32 %v636, %v846
    %v848 = vand.u32 %v120, 4294901760
    %v849 = vsub.f32 %v120, %v848
    %850 = vmatmul.f32.gmra.mxu0 %v849
    %v851 = vpop.f32.mrf.mxu0
    %v852 = vadd.f32 %v640, %v851
    %v853 = vand.u32 %v121, 4294901760
    %v854 = vsub.f32 %v121, %v853
    %855 = vmatmul.f32.gmra.mxu0 %v854
    %v856 = vpop.f32.mrf.mxu0
    %v857 = vadd.f32 %v644, %v856
    %v858 = vand.u32 %v122, 4294901760
    %v859 = vsub.f32 %v122, %v858
    %860 = vmatmul.f32.gmra.mxu0 %v859
    %v861 = vpop.f32.mrf.mxu0
    %v862 = vadd.f32 %v648, %v861
    %v863 = vand.u32 %v123, 4294901760
    %v864 = vsub.f32 %v123, %v863
    %865 = vmatmul.f32.gmra.mxu0 %v864
    %v866 = vpop.f32.mrf.mxu0
    %v867 = vadd.f32 %v652, %v866
    %v868 = vand.u32 %v124, 4294901760
    %v869 = vsub.f32 %v124, %v868
    %870 = vmatmul.f32.gmra.mxu0 %v869
    %v871 = vpop.f32.mrf.mxu0
    %v872 = vadd.f32 %v656, %v871
    %v873 = vand.u32 %v125, 4294901760
    %v874 = vsub.f32 %v125, %v873
    %875 = vmatmul.f32.gmra.mxu0 %v874
    %v876 = vpop.f32.mrf.mxu0
    %v877 = vadd.f32 %v660, %v876
    %v878 = vand.u32 %v126, 4294901760
    %v879 = vsub.f32 %v126, %v878
    %880 = vmatmul.f32.gmra.mxu0 %v879
    %v881 = vpop.f32.mrf.mxu0
    %v882 = vadd.f32 %v664, %v881
    %v883 = vand.u32 %v127, 4294901760
    %v884 = vsub.f32 %v127, %v883
    %885 = vmatmul.f32.gmra.mxu0 %v884
    %v886 = vpop.f32.mrf.mxu0
    %v887 = vadd.f32 %v668, %v886
    %v888 = vand.u32 %v128, 4294901760
    %v889 = vsub.f32 %v128, %v888
    %890 = vmatmul.f32.gmra.mxu0 %v889
    %v891 = vpop.f32.mrf.mxu0
    %v892 = vadd.f32 %v672, %v891
    %v893 = vand.u32 %v129, 4294901760
    %v894 = vsub.f32 %v129, %v893
    %895 = vmatmul.f32.gmra.mxu0 %v894
    %v896 = vpop.f32.mrf.mxu0
    %v897 = vadd.f32 %v676, %v896
    %v898 = vand.u32 %v130, 4294901760
    %v899 = vsub.f32 %v130, %v898
    %900 = vmatmul.f32.gmra.mxu0 %v899
    %v901 = vpop.f32.mrf.mxu0
    %v902 = vadd.f32 %v680, %v901
    %v903 = vand.u32 %v131, 4294901760
    %v904 = vsub.f32 %v131, %v903
    %905 = vmatmul.f32.gmra.mxu0 %v904
    %v906 = vpop.f32.mrf.mxu0
    %v907 = vadd.f32 %v684, %v906
    %v908 = vand.u32 %v132, 4294901760
    %v909 = vsub.f32 %v132, %v908
    %910 = vmatmul.f32.gmra.mxu0 %v909
    %v911 = vpop.f32.mrf.mxu0
    %v912 = vadd.f32 %v688, %v911
    %v913 = vand.u32 %v133, 4294901760
    %v914 = vsub.f32 %v133, %v913
    %915 = vmatmul.f32.gmra.mxu0 %v914
    %v916 = vpop.f32.mrf.mxu0
    %v917 = vadd.f32 %v692, %v916
    %v918 = vand.u32 %v134, 4294901760
    %v919 = vsub.f32 %v134, %v918
    %920 = vmatmul.f32.gmra.mxu0 %v919
    %v921 = vpop.f32.mrf.mxu0
    %v922 = vadd.f32 %v696, %v921
    %v923 = vand.u32 %v135, 4294901760
    %v924 = vsub.f32 %v135, %v923
    %925 = vmatmul.f32.gmra.mxu0 %v924
    %v926 = vpop.f32.mrf.mxu0
    %v927 = vadd.f32 %v700, %v926
    %v928 = vand.u32 %v136, 4294901760
    %v929 = vsub.f32 %v136, %v928
    %930 = vmatmul.f32.gmra.mxu0 %v929
    %v931 = vpop.f32.mrf.mxu0
    %v932 = vadd.f32 %v704, %v931
    %v933 = vand.u32 %v137, 4294901760
    %v934 = vsub.f32 %v137, %v933
    %935 = vmatmul.f32.gmra.mxu0 %v934
    %v936 = vpop.f32.mrf.mxu0
    %v937 = vadd.f32 %v708, %v936
    %v938 = vand.u32 %v138, 4294901760
    %v939 = vsub.f32 %v138, %v938
    %940 = vmatmul.f32.gmra.mxu0 %v939
    %v941 = vpop.f32.mrf.mxu0
    %v942 = vadd.f32 %v712, %v941
    %v943 = vand.u32 %v139, 4294901760
    %v944 = vsub.f32 %v139, %v943
    %945 = vmatmul.f32.gmra.mxu0 %v944
    %v946 = vpop.f32.mrf.mxu0
    %v947 = vadd.f32 %v716, %v946
    %v948 = vand.u32 %v140, 4294901760
    %v949 = vsub.f32 %v140, %v948
    %950 = vmatmul.f32.gmra.mxu0 %v949
    %v951 = vpop.f32.mrf.mxu0
    %v952 = vadd.f32 %v720, %v951
    %v953 = vand.u32 %v141, 4294901760
    %v954 = vsub.f32 %v141, %v953
    %955 = vmatmul.f32.gmra.mxu0 %v954
    %v956 = vpop.f32.mrf.mxu0
    %v957 = vadd.f32 %v724, %v956
    %v958 = vand.u32 %v142, 4294901760
    %v959 = vsub.f32 %v142, %v958
    %960 = vmatmul.f32.gmra.mxu0 %v959
    %v961 = vpop.f32.mrf.mxu0
    %v962 = vadd.f32 %v728, %v961
    %v963 = vand.u32 %v143, 4294901760
    %v964 = vsub.f32 %v143, %v963
    %965 = vmatmul.f32.gmra.mxu0 %v964
    %v966 = vpop.f32.mrf.mxu0
    %v967 = vadd.f32 %v732, %v966
    %v968 = vand.u32 %v144, 4294901760
    %v969 = vsub.f32 %v144, %v968
    %970 = vmatmul.f32.gmra.mxu0 %v969
    %v971 = vpop.f32.mrf.mxu0
    %v972 = vadd.f32 %v736, %v971
    %v973 = vand.u32 %v145, 4294901760
    %v974 = vsub.f32 %v145, %v973
    %975 = vmatmul.f32.gmra.mxu0 %v974
    %v976 = vpop.f32.mrf.mxu0
    %v977 = vadd.f32 %v740, %v976
    %v978 = vand.u32 %v146, 4294901760
    %v979 = vsub.f32 %v146, %v978
    %980 = vmatmul.f32.gmra.mxu0 %v979
    %v981 = vpop.f32.mrf.mxu0
    %v982 = vadd.f32 %v744, %v981
    %v983 = vand.u32 %v147, 4294901760
    %v984 = vsub.f32 %v147, %v983
    %985 = vmatmul.f32.gmra.mxu0 %v984
    %v986 = vpop.f32.mrf.mxu0
    %v987 = vadd.f32 %v748, %v986
    %v988 = vand.u32 %v148, 4294901760
    %v989 = vsub.f32 %v148, %v988
    %990 = vmatmul.f32.gmra.mxu0 %v989
    %v991 = vpop.f32.mrf.mxu0
    %v992 = vadd.f32 %v752, %v991
    %v993 = vand.u32 %v149, 4294901760
    %v994 = vsub.f32 %v149, %v993
    %995 = vmatmul.f32.gmra.mxu0 %v994
    %v996 = vpop.f32.mrf.mxu0
    %v997 = vadd.f32 %v756, %v996
    %v998 = vand.u32 %v150, 4294901760
    %v999 = vsub.f32 %v150, %v998
    %1000 = vmatmul.f32.gmra.mxu0 %v999
    %v1001 = vpop.f32.mrf.mxu0
    %v1002 = vadd.f32 %v760, %v1001
    %v1003 = vand.u32 %v151, 4294901760
    %v1004 = vsub.f32 %v151, %v1003
    %1005 = vmatmul.f32.gmra.mxu0 %v1004
    %v1006 = vpop.f32.mrf.mxu0
    %v1007 = vadd.f32 %v764, %v1006
    %v1008 = vand.u32 %v152, 4294901760
    %v1009 = vsub.f32 %v152, %v1008
    %1010 = vmatmul.f32.gmra.mxu0 %v1009
    %v1011 = vpop.f32.mrf.mxu0
    %v1012 = vadd.f32 %v768, %v1011
    %v1013 = vand.u32 %v153, 4294901760
    %v1014 = vsub.f32 %v153, %v1013
    %1015 = vmatmul.f32.gmra.mxu0 %v1014
    %v1016 = vpop.f32.mrf.mxu0
    %v1017 = vadd.f32 %v772, %v1016
    %v1018 = vand.u32 %v154, 4294901760
    %v1019 = vsub.f32 %v154, %v1018
    %1020 = vmatmul.f32.gmra.mxu0 %v1019
    %v1021 = vpop.f32.mrf.mxu0
    %v1022 = vadd.f32 %v776, %v1021
    %v1023 = vand.u32 %v155, 4294901760
    %v1024 = vsub.f32 %v155, %v1023
    %1025 = vmatmul.f32.gmra.mxu0 %v1024
    %v1026 = vpop.f32.mrf.mxu0
    %v1027 = vadd.f32 %v780, %v1026
    %v1028 = vand.u32 %v156, 4294901760
    %v1029 = vsub.f32 %v156, %v1028
    %1030 = vmatmul.f32.gmra.mxu0 %v1029
    %v1031 = vpop.f32.mrf.mxu0
    %v1032 = vadd.f32 %v784, %v1031
    %v1033 = vand.u32 %v157, 4294901760
    %v1034 = vsub.f32 %v157, %v1033
    %1035 = vmatmul.f32.gmra.mxu0 %v1034
    %v1036 = vpop.f32.mrf.mxu0
    %v1037 = vadd.f32 %v788, %v1036
    %1038 = vdwg.mxu0
    %v1039 = vand.u32 %v173, 4294901760
    %1040 = vmatpush.msra.mxu0 %v1039
    %v1041 = vand.u32 %v172, 4294901760
    %1042 = vmatpush.msra.mxu0 %v1041
    %v1043 = vand.u32 %v171, 4294901760
    %1044 = vmatpush.msra.mxu0 %v1043
    %v1045 = vand.u32 %v170, 4294901760
    %1046 = vmatpush.msra.mxu0 %v1045
    %v1047 = vand.u32 %v169, 4294901760
    %1048 = vmatpush.msra.mxu0 %v1047
    %v1049 = vand.u32 %v168, 4294901760
    %1050 = vmatpush.msra.mxu0 %v1049
    %v1051 = vand.u32 %v167, 4294901760
    %1052 = vmatpush.msra.mxu0 %v1051
    %v1053 = vand.u32 %v166, 4294901760
    %1054 = vmatpush.msra.mxu0 %v1053
    %v1055 = vand.u32 %v165, 4294901760
    %1056 = vmatpush.msra.mxu0 %v1055
    %v1057 = vand.u32 %v164, 4294901760
    %1058 = vmatpush.msra.mxu0 %v1057
    %v1059 = vand.u32 %v163, 4294901760
    %1060 = vmatpush.msra.mxu0 %v1059
    %v1061 = vand.u32 %v162, 4294901760
    %1062 = vmatpush.msra.mxu0 %v1061
    %v1063 = vand.u32 %v161, 4294901760
    %1064 = vmatpush.msra.mxu0 %v1063
    %v1065 = vand.u32 %v160, 4294901760
    %1066 = vmatpush.msra.mxu0 %v1065
    %v1067 = vand.u32 %v159, 4294901760
    %1068 = vmatpush.msra.mxu0 %v1067
    %v1069 = vand.u32 %v158, 4294901760
    %1070 = vmatpush.msra.mxu0 %v1069
    %v1071 = vand.u32 %v118, 4294901760
    %v1072 = vsub.f32 %v118, %v1071
    %v1073 = vand.u32 %v1072, 4294901760
    %1074 = vmatmul.f32.gmra.mxu0 %v1073
    %v1075 = vpop.f32.mrf.mxu0
    %v1076 = vadd.f32 %v842, %v1075
    %v1077 = vand.u32 %v119, 4294901760
    %v1078 = vsub.f32 %v119, %v1077
    %v1079 = vand.u32 %v1078, 4294901760
    %1080 = vmatmul.f32.gmra.mxu0 %v1079
    %v1081 = vpop.f32.mrf.mxu0
    %v1082 = vadd.f32 %v847, %v1081
    %v1083 = vand.u32 %v120, 4294901760
    %v1084 = vsub.f32 %v120, %v1083
    %v1085 = vand.u32 %v1084, 4294901760
    %1086 = vmatmul.f32.gmra.mxu0 %v1085
    %v1087 = vpop.f32.mrf.mxu0
    %v1088 = vadd.f32 %v852, %v1087
    %v1089 = vand.u32 %v121, 4294901760
    %v1090 = vsub.f32 %v121, %v1089
    %v1091 = vand.u32 %v1090, 4294901760
    %1092 = vmatmul.f32.gmra.mxu0 %v1091
    %v1093 = vpop.f32.mrf.mxu0
    %v1094 = vadd.f32 %v857, %v1093
    %v1095 = vand.u32 %v122, 4294901760
    %v1096 = vsub.f32 %v122, %v1095
    %v1097 = vand.u32 %v1096, 4294901760
    %1098 = vmatmul.f32.gmra.mxu0 %v1097
    %v1099 = vpop.f32.mrf.mxu0
    %v1100 = vadd.f32 %v862, %v1099
    %v1101 = vand.u32 %v123, 4294901760
    %v1102 = vsub.f32 %v123, %v1101
    %v1103 = vand.u32 %v1102, 4294901760
    %1104 = vmatmul.f32.gmra.mxu0 %v1103
    %v1105 = vpop.f32.mrf.mxu0
    %v1106 = vadd.f32 %v867, %v1105
    %v1107 = vand.u32 %v124, 4294901760
    %v1108 = vsub.f32 %v124, %v1107
    %v1109 = vand.u32 %v1108, 4294901760
    %1110 = vmatmul.f32.gmra.mxu0 %v1109
    %v1111 = vpop.f32.mrf.mxu0
    %v1112 = vadd.f32 %v872, %v1111
    %v1113 = vand.u32 %v125, 4294901760
    %v1114 = vsub.f32 %v125, %v1113
    %v1115 = vand.u32 %v1114, 4294901760
    %1116 = vmatmul.f32.gmra.mxu0 %v1115
    %v1117 = vpop.f32.mrf.mxu0
    %v1118 = vadd.f32 %v877, %v1117
    %v1119 = vand.u32 %v126, 4294901760
    %v1120 = vsub.f32 %v126, %v1119
    %v1121 = vand.u32 %v1120, 4294901760
    %1122 = vmatmul.f32.gmra.mxu0 %v1121
    %v1123 = vpop.f32.mrf.mxu0
    %v1124 = vadd.f32 %v882, %v1123
    %v1125 = vand.u32 %v127, 4294901760
    %v1126 = vsub.f32 %v127, %v1125
    %v1127 = vand.u32 %v1126, 4294901760
    %1128 = vmatmul.f32.gmra.mxu0 %v1127
    %v1129 = vpop.f32.mrf.mxu0
    %v1130 = vadd.f32 %v887, %v1129
    %v1131 = vand.u32 %v128, 4294901760
    %v1132 = vsub.f32 %v128, %v1131
    %v1133 = vand.u32 %v1132, 4294901760
    %1134 = vmatmul.f32.gmra.mxu0 %v1133
    %v1135 = vpop.f32.mrf.mxu0
    %v1136 = vadd.f32 %v892, %v1135
    %v1137 = vand.u32 %v129, 4294901760
    %v1138 = vsub.f32 %v129, %v1137
    %v1139 = vand.u32 %v1138, 4294901760
    %1140 = vmatmul.f32.gmra.mxu0 %v1139
    %v1141 = vpop.f32.mrf.mxu0
    %v1142 = vadd.f32 %v897, %v1141
    %v1143 = vand.u32 %v130, 4294901760
    %v1144 = vsub.f32 %v130, %v1143
    %v1145 = vand.u32 %v1144, 4294901760
    %1146 = vmatmul.f32.gmra.mxu0 %v1145
    %v1147 = vpop.f32.mrf.mxu0
    %v1148 = vadd.f32 %v902, %v1147
    %v1149 = vand.u32 %v131, 4294901760
    %v1150 = vsub.f32 %v131, %v1149
    %v1151 = vand.u32 %v1150, 4294901760
    %1152 = vmatmul.f32.gmra.mxu0 %v1151
    %v1153 = vpop.f32.mrf.mxu0
    %v1154 = vadd.f32 %v907, %v1153
    %v1155 = vand.u32 %v132, 4294901760
    %v1156 = vsub.f32 %v132, %v1155
    %v1157 = vand.u32 %v1156, 4294901760
    %1158 = vmatmul.f32.gmra.mxu0 %v1157
    %v1159 = vpop.f32.mrf.mxu0
    %v1160 = vadd.f32 %v912, %v1159
    %v1161 = vand.u32 %v133, 4294901760
    %v1162 = vsub.f32 %v133, %v1161
    %v1163 = vand.u32 %v1162, 4294901760
    %1164 = vmatmul.f32.gmra.mxu0 %v1163
    %v1165 = vpop.f32.mrf.mxu0
    %v1166 = vadd.f32 %v917, %v1165
    %v1167 = vand.u32 %v134, 4294901760
    %v1168 = vsub.f32 %v134, %v1167
    %v1169 = vand.u32 %v1168, 4294901760
    %1170 = vmatmul.f32.gmra.mxu0 %v1169
    %v1171 = vpop.f32.mrf.mxu0
    %v1172 = vadd.f32 %v922, %v1171
    %v1173 = vand.u32 %v135, 4294901760
    %v1174 = vsub.f32 %v135, %v1173
    %v1175 = vand.u32 %v1174, 4294901760
    %1176 = vmatmul.f32.gmra.mxu0 %v1175
    %v1177 = vpop.f32.mrf.mxu0
    %v1178 = vadd.f32 %v927, %v1177
    %v1179 = vand.u32 %v136, 4294901760
    %v1180 = vsub.f32 %v136, %v1179
    %v1181 = vand.u32 %v1180, 4294901760
    %1182 = vmatmul.f32.gmra.mxu0 %v1181
    %v1183 = vpop.f32.mrf.mxu0
    %v1184 = vadd.f32 %v932, %v1183
    %v1185 = vand.u32 %v137, 4294901760
    %v1186 = vsub.f32 %v137, %v1185
    %v1187 = vand.u32 %v1186, 4294901760
    %1188 = vmatmul.f32.gmra.mxu0 %v1187
    %v1189 = vpop.f32.mrf.mxu0
    %v1190 = vadd.f32 %v937, %v1189
    %v1191 = vand.u32 %v138, 4294901760
    %v1192 = vsub.f32 %v138, %v1191
    %v1193 = vand.u32 %v1192, 4294901760
    %1194 = vmatmul.f32.gmra.mxu0 %v1193
    %v1195 = vpop.f32.mrf.mxu0
    %v1196 = vadd.f32 %v942, %v1195
    %v1197 = vand.u32 %v139, 4294901760
    %v1198 = vsub.f32 %v139, %v1197
    %v1199 = vand.u32 %v1198, 4294901760
    %1200 = vmatmul.f32.gmra.mxu0 %v1199
    %v1201 = vpop.f32.mrf.mxu0
    %v1202 = vadd.f32 %v947, %v1201
    %v1203 = vand.u32 %v140, 4294901760
    %v1204 = vsub.f32 %v140, %v1203
    %v1205 = vand.u32 %v1204, 4294901760
    %1206 = vmatmul.f32.gmra.mxu0 %v1205
    %v1207 = vpop.f32.mrf.mxu0
    %v1208 = vadd.f32 %v952, %v1207
    %v1209 = vand.u32 %v141, 4294901760
    %v1210 = vsub.f32 %v141, %v1209
    %v1211 = vand.u32 %v1210, 4294901760
    %1212 = vmatmul.f32.gmra.mxu0 %v1211
    %v1213 = vpop.f32.mrf.mxu0
    %v1214 = vadd.f32 %v957, %v1213
    %v1215 = vand.u32 %v142, 4294901760
    %v1216 = vsub.f32 %v142, %v1215
    %v1217 = vand.u32 %v1216, 4294901760
    %1218 = vmatmul.f32.gmra.mxu0 %v1217
    %v1219 = vpop.f32.mrf.mxu0
    %v1220 = vadd.f32 %v962, %v1219
    %v1221 = vand.u32 %v143, 4294901760
    %v1222 = vsub.f32 %v143, %v1221
    %v1223 = vand.u32 %v1222, 4294901760
    %1224 = vmatmul.f32.gmra.mxu0 %v1223
    %v1225 = vpop.f32.mrf.mxu0
    %v1226 = vadd.f32 %v967, %v1225
    %v1227 = vand.u32 %v144, 4294901760
    %v1228 = vsub.f32 %v144, %v1227
    %v1229 = vand.u32 %v1228, 4294901760
    %1230 = vmatmul.f32.gmra.mxu0 %v1229
    %v1231 = vpop.f32.mrf.mxu0
    %v1232 = vadd.f32 %v972, %v1231
    %v1233 = vand.u32 %v145, 4294901760
    %v1234 = vsub.f32 %v145, %v1233
    %v1235 = vand.u32 %v1234, 4294901760
    %1236 = vmatmul.f32.gmra.mxu0 %v1235
    %v1237 = vpop.f32.mrf.mxu0
    %v1238 = vadd.f32 %v977, %v1237
    %v1239 = vand.u32 %v146, 4294901760
    %v1240 = vsub.f32 %v146, %v1239
    %v1241 = vand.u32 %v1240, 4294901760
    %1242 = vmatmul.f32.gmra.mxu0 %v1241
    %v1243 = vpop.f32.mrf.mxu0
    %v1244 = vadd.f32 %v982, %v1243
    %v1245 = vand.u32 %v147, 4294901760
    %v1246 = vsub.f32 %v147, %v1245
    %v1247 = vand.u32 %v1246, 4294901760
    %1248 = vmatmul.f32.gmra.mxu0 %v1247
    %v1249 = vpop.f32.mrf.mxu0
    %v1250 = vadd.f32 %v987, %v1249
    %v1251 = vand.u32 %v148, 4294901760
    %v1252 = vsub.f32 %v148, %v1251
    %v1253 = vand.u32 %v1252, 4294901760
    %1254 = vmatmul.f32.gmra.mxu0 %v1253
    %v1255 = vpop.f32.mrf.mxu0
    %v1256 = vadd.f32 %v992, %v1255
    %v1257 = vand.u32 %v149, 4294901760
    %v1258 = vsub.f32 %v149, %v1257
    %v1259 = vand.u32 %v1258, 4294901760
    %1260 = vmatmul.f32.gmra.mxu0 %v1259
    %v1261 = vpop.f32.mrf.mxu0
    %v1262 = vadd.f32 %v997, %v1261
    %v1263 = vand.u32 %v150, 4294901760
    %v1264 = vsub.f32 %v150, %v1263
    %v1265 = vand.u32 %v1264, 4294901760
    %1266 = vmatmul.f32.gmra.mxu0 %v1265
    %v1267 = vpop.f32.mrf.mxu0
    %v1268 = vadd.f32 %v1002, %v1267
    %v1269 = vand.u32 %v151, 4294901760
    %v1270 = vsub.f32 %v151, %v1269
    %v1271 = vand.u32 %v1270, 4294901760
    %1272 = vmatmul.f32.gmra.mxu0 %v1271
    %v1273 = vpop.f32.mrf.mxu0
    %v1274 = vadd.f32 %v1007, %v1273
    %v1275 = vand.u32 %v152, 4294901760
    %v1276 = vsub.f32 %v152, %v1275
    %v1277 = vand.u32 %v1276, 4294901760
    %1278 = vmatmul.f32.gmra.mxu0 %v1277
    %v1279 = vpop.f32.mrf.mxu0
    %v1280 = vadd.f32 %v1012, %v1279
    %v1281 = vand.u32 %v153, 4294901760
    %v1282 = vsub.f32 %v153, %v1281
    %v1283 = vand.u32 %v1282, 4294901760
    %1284 = vmatmul.f32.gmra.mxu0 %v1283
    %v1285 = vpop.f32.mrf.mxu0
    %v1286 = vadd.f32 %v1017, %v1285
    %v1287 = vand.u32 %v154, 4294901760
    %v1288 = vsub.f32 %v154, %v1287
    %v1289 = vand.u32 %v1288, 4294901760
    %1290 = vmatmul.f32.gmra.mxu0 %v1289
    %v1291 = vpop.f32.mrf.mxu0
    %v1292 = vadd.f32 %v1022, %v1291
    %v1293 = vand.u32 %v155, 4294901760
    %v1294 = vsub.f32 %v155, %v1293
    %v1295 = vand.u32 %v1294, 4294901760
    %1296 = vmatmul.f32.gmra.mxu0 %v1295
    %v1297 = vpop.f32.mrf.mxu0
    %v1298 = vadd.f32 %v1027, %v1297
    %v1299 = vand.u32 %v156, 4294901760
    %v1300 = vsub.f32 %v156, %v1299
    %v1301 = vand.u32 %v1300, 4294901760
    %1302 = vmatmul.f32.gmra.mxu0 %v1301
    %v1303 = vpop.f32.mrf.mxu0
    %v1304 = vadd.f32 %v1032, %v1303
    %v1305 = vand.u32 %v157, 4294901760
    %v1306 = vsub.f32 %v157, %v1305
    %v1307 = vand.u32 %v1306, 4294901760
    %1308 = vmatmul.f32.gmra.mxu0 %v1307
    %v1309 = vpop.f32.mrf.mxu0
    %v1310 = vadd.f32 %v1037, %v1309
    %1311 = vdwg.mxu0
    %v1312 = vand.u32 %v173, 4294901760
    %v1313 = vsub.f32 %v173, %v1312
    %v1314 = vand.u32 %v1313, 4294901760
    %1315 = vmatpush.msra.mxu0 %v1314
    %v1316 = vand.u32 %v172, 4294901760
    %v1317 = vsub.f32 %v172, %v1316
    %v1318 = vand.u32 %v1317, 4294901760
    %1319 = vmatpush.msra.mxu0 %v1318
    %v1320 = vand.u32 %v171, 4294901760
    %v1321 = vsub.f32 %v171, %v1320
    %v1322 = vand.u32 %v1321, 4294901760
    %1323 = vmatpush.msra.mxu0 %v1322
    %v1324 = vand.u32 %v170, 4294901760
    %v1325 = vsub.f32 %v170, %v1324
    %v1326 = vand.u32 %v1325, 4294901760
    %1327 = vmatpush.msra.mxu0 %v1326
    %v1328 = vand.u32 %v169, 4294901760
    %v1329 = vsub.f32 %v169, %v1328
    %v1330 = vand.u32 %v1329, 4294901760
    %1331 = vmatpush.msra.mxu0 %v1330
    %v1332 = vand.u32 %v168, 4294901760
    %v1333 = vsub.f32 %v168, %v1332
    %v1334 = vand.u32 %v1333, 4294901760
    %1335 = vmatpush.msra.mxu0 %v1334
    %v1336 = vand.u32 %v167, 4294901760
    %v1337 = vsub.f32 %v167, %v1336
    %v1338 = vand.u32 %v1337, 4294901760
    %1339 = vmatpush.msra.mxu0 %v1338
    %v1340 = vand.u32 %v166, 4294901760
    %v1341 = vsub.f32 %v166, %v1340
    %v1342 = vand.u32 %v1341, 4294901760
    %1343 = vmatpush.msra.mxu0 %v1342
    %v1344 = vand.u32 %v165, 4294901760
    %v1345 = vsub.f32 %v165, %v1344
    %v1346 = vand.u32 %v1345, 4294901760
    %1347 = vmatpush.msra.mxu0 %v1346
    %v1348 = vand.u32 %v164, 4294901760
    %v1349 = vsub.f32 %v164, %v1348
    %v1350 = vand.u32 %v1349, 4294901760
    %1351 = vmatpush.msra.mxu0 %v1350
    %v1352 = vand.u32 %v163, 4294901760
    %v1353 = vsub.f32 %v163, %v1352
    %v1354 = vand.u32 %v1353, 4294901760
    %1355 = vmatpush.msra.mxu0 %v1354
    %v1356 = vand.u32 %v162, 4294901760
    %v1357 = vsub.f32 %v162, %v1356
    %v1358 = vand.u32 %v1357, 4294901760
    %1359 = vmatpush.msra.mxu0 %v1358
    %v1360 = vand.u32 %v161, 4294901760
    %v1361 = vsub.f32 %v161, %v1360
    %v1362 = vand.u32 %v1361, 4294901760
    %1363 = vmatpush.msra.mxu0 %v1362
    %v1364 = vand.u32 %v160, 4294901760
    %v1365 = vsub.f32 %v160, %v1364
    %v1366 = vand.u32 %v1365, 4294901760
    %1367 = vmatpush.msra.mxu0 %v1366
    %v1368 = vand.u32 %v159, 4294901760
    %v1369 = vsub.f32 %v159, %v1368
    %v1370 = vand.u32 %v1369, 4294901760
    %1371 = vmatpush.msra.mxu0 %v1370
    %v1372 = vand.u32 %v158, 4294901760
    %v1373 = vsub.f32 %v158, %v1372
    %v1374 = vand.u32 %v1373, 4294901760
    %1375 = vmatpush.msra.mxu0 %v1374
    %v1376 = vand.u32 %v118, 4294901760
    %1377 = vmatmul.f32.gmra.mxu0 %v1376
    %v1378 = vpop.f32.mrf.mxu0
    %v1379 = vadd.f32 %v1076, %v1378
    %v1380 = vand.u32 %v119, 4294901760
    %1381 = vmatmul.f32.gmra.mxu0 %v1380
    %v1382 = vpop.f32.mrf.mxu0
    %v1383 = vadd.f32 %v1082, %v1382
    %v1384 = vand.u32 %v120, 4294901760
    %1385 = vmatmul.f32.gmra.mxu0 %v1384
    %v1386 = vpop.f32.mrf.mxu0
    %v1387 = vadd.f32 %v1088, %v1386
    %v1388 = vand.u32 %v121, 4294901760
    %1389 = vmatmul.f32.gmra.mxu0 %v1388
    %v1390 = vpop.f32.mrf.mxu0
    %v1391 = vadd.f32 %v1094, %v1390
    %v1392 = vand.u32 %v122, 4294901760
    %1393 = vmatmul.f32.gmra.mxu0 %v1392
    %v1394 = vpop.f32.mrf.mxu0
    %v1395 = vadd.f32 %v1100, %v1394
    %v1396 = vand.u32 %v123, 4294901760
    %1397 = vmatmul.f32.gmra.mxu0 %v1396
    %v1398 = vpop.f32.mrf.mxu0
    %v1399 = vadd.f32 %v1106, %v1398
    %v1400 = vand.u32 %v124, 4294901760
    %1401 = vmatmul.f32.gmra.mxu0 %v1400
    %v1402 = vpop.f32.mrf.mxu0
    %v1403 = vadd.f32 %v1112, %v1402
    %v1404 = vand.u32 %v125, 4294901760
    %1405 = vmatmul.f32.gmra.mxu0 %v1404
    %v1406 = vpop.f32.mrf.mxu0
    %v1407 = vadd.f32 %v1118, %v1406
    %v1408 = vand.u32 %v126, 4294901760
    %1409 = vmatmul.f32.gmra.mxu0 %v1408
    %v1410 = vpop.f32.mrf.mxu0
    %v1411 = vadd.f32 %v1124, %v1410
    %v1412 = vand.u32 %v127, 4294901760
    %1413 = vmatmul.f32.gmra.mxu0 %v1412
    %v1414 = vpop.f32.mrf.mxu0
    %v1415 = vadd.f32 %v1130, %v1414
    %v1416 = vand.u32 %v128, 4294901760
    %1417 = vmatmul.f32.gmra.mxu0 %v1416
    %v1418 = vpop.f32.mrf.mxu0
    %v1419 = vadd.f32 %v1136, %v1418
    %v1420 = vand.u32 %v129, 4294901760
    %1421 = vmatmul.f32.gmra.mxu0 %v1420
    %v1422 = vpop.f32.mrf.mxu0
    %v1423 = vadd.f32 %v1142, %v1422
    %v1424 = vand.u32 %v130, 4294901760
    %1425 = vmatmul.f32.gmra.mxu0 %v1424
    %v1426 = vpop.f32.mrf.mxu0
    %v1427 = vadd.f32 %v1148, %v1426
    %v1428 = vand.u32 %v131, 4294901760
    %1429 = vmatmul.f32.gmra.mxu0 %v1428
    %v1430 = vpop.f32.mrf.mxu0
    %v1431 = vadd.f32 %v1154, %v1430
    %v1432 = vand.u32 %v132, 4294901760
    %1433 = vmatmul.f32.gmra.mxu0 %v1432
    %v1434 = vpop.f32.mrf.mxu0
    %v1435 = vadd.f32 %v1160, %v1434
    %v1436 = vand.u32 %v133, 4294901760
    %1437 = vmatmul.f32.gmra.mxu0 %v1436
    %v1438 = vpop.f32.mrf.mxu0
    %v1439 = vadd.f32 %v1166, %v1438
    %v1440 = vand.u32 %v134, 4294901760
    %1441 = vmatmul.f32.gmra.mxu0 %v1440
    %v1442 = vpop.f32.mrf.mxu0
    %v1443 = vadd.f32 %v1172, %v1442
    %v1444 = vand.u32 %v135, 4294901760
    %1445 = vmatmul.f32.gmra.mxu0 %v1444
    %v1446 = vpop.f32.mrf.mxu0
    %v1447 = vadd.f32 %v1178, %v1446
    %v1448 = vand.u32 %v136, 4294901760
    %1449 = vmatmul.f32.gmra.mxu0 %v1448
    %v1450 = vpop.f32.mrf.mxu0
    %v1451 = vadd.f32 %v1184, %v1450
    %v1452 = vand.u32 %v137, 4294901760
    %1453 = vmatmul.f32.gmra.mxu0 %v1452
    %v1454 = vpop.f32.mrf.mxu0
    %v1455 = vadd.f32 %v1190, %v1454
    %v1456 = vand.u32 %v138, 4294901760
    %1457 = vmatmul.f32.gmra.mxu0 %v1456
    %v1458 = vpop.f32.mrf.mxu0
    %v1459 = vadd.f32 %v1196, %v1458
    %v1460 = vand.u32 %v139, 4294901760
    %1461 = vmatmul.f32.gmra.mxu0 %v1460
    %v1462 = vpop.f32.mrf.mxu0
    %v1463 = vadd.f32 %v1202, %v1462
    %v1464 = vand.u32 %v140, 4294901760
    %1465 = vmatmul.f32.gmra.mxu0 %v1464
    %v1466 = vpop.f32.mrf.mxu0
    %v1467 = vadd.f32 %v1208, %v1466
    %v1468 = vand.u32 %v141, 4294901760
    %1469 = vmatmul.f32.gmra.mxu0 %v1468
    %v1470 = vpop.f32.mrf.mxu0
    %v1471 = vadd.f32 %v1214, %v1470
    %v1472 = vand.u32 %v142, 4294901760
    %1473 = vmatmul.f32.gmra.mxu0 %v1472
    %v1474 = vpop.f32.mrf.mxu0
    %v1475 = vadd.f32 %v1220, %v1474
    %v1476 = vand.u32 %v143, 4294901760
    %1477 = vmatmul.f32.gmra.mxu0 %v1476
    %v1478 = vpop.f32.mrf.mxu0
    %v1479 = vadd.f32 %v1226, %v1478
    %v1480 = vand.u32 %v144, 4294901760
    %1481 = vmatmul.f32.gmra.mxu0 %v1480
    %v1482 = vpop.f32.mrf.mxu0
    %v1483 = vadd.f32 %v1232, %v1482
    %v1484 = vand.u32 %v145, 4294901760
    %1485 = vmatmul.f32.gmra.mxu0 %v1484
    %v1486 = vpop.f32.mrf.mxu0
    %v1487 = vadd.f32 %v1238, %v1486
    %v1488 = vand.u32 %v146, 4294901760
    %1489 = vmatmul.f32.gmra.mxu0 %v1488
    %v1490 = vpop.f32.mrf.mxu0
    %v1491 = vadd.f32 %v1244, %v1490
    %v1492 = vand.u32 %v147, 4294901760
    %1493 = vmatmul.f32.gmra.mxu0 %v1492
    %v1494 = vpop.f32.mrf.mxu0
    %v1495 = vadd.f32 %v1250, %v1494
    %v1496 = vand.u32 %v148, 4294901760
    %1497 = vmatmul.f32.gmra.mxu0 %v1496
    %v1498 = vpop.f32.mrf.mxu0
    %v1499 = vadd.f32 %v1256, %v1498
    %v1500 = vand.u32 %v149, 4294901760
    %1501 = vmatmul.f32.gmra.mxu0 %v1500
    %v1502 = vpop.f32.mrf.mxu0
    %v1503 = vadd.f32 %v1262, %v1502
    %v1504 = vand.u32 %v150, 4294901760
    %1505 = vmatmul.f32.gmra.mxu0 %v1504
    %v1506 = vpop.f32.mrf.mxu0
    %v1507 = vadd.f32 %v1268, %v1506
    %v1508 = vand.u32 %v151, 4294901760
    %1509 = vmatmul.f32.gmra.mxu0 %v1508
    %v1510 = vpop.f32.mrf.mxu0
    %v1511 = vadd.f32 %v1274, %v1510
    %v1512 = vand.u32 %v152, 4294901760
    %1513 = vmatmul.f32.gmra.mxu0 %v1512
    %v1514 = vpop.f32.mrf.mxu0
    %v1515 = vadd.f32 %v1280, %v1514
    %v1516 = vand.u32 %v153, 4294901760
    %1517 = vmatmul.f32.gmra.mxu0 %v1516
    %v1518 = vpop.f32.mrf.mxu0
    %v1519 = vadd.f32 %v1286, %v1518
    %v1520 = vand.u32 %v154, 4294901760
    %1521 = vmatmul.f32.gmra.mxu0 %v1520
    %v1522 = vpop.f32.mrf.mxu0
    %v1523 = vadd.f32 %v1292, %v1522
    %v1524 = vand.u32 %v155, 4294901760
    %1525 = vmatmul.f32.gmra.mxu0 %v1524
    %v1526 = vpop.f32.mrf.mxu0
    %v1527 = vadd.f32 %v1298, %v1526
    %v1528 = vand.u32 %v156, 4294901760
    %1529 = vmatmul.f32.gmra.mxu0 %v1528
    %v1530 = vpop.f32.mrf.mxu0
    %v1531 = vadd.f32 %v1304, %v1530
    %v1532 = vand.u32 %v157, 4294901760
    %1533 = vmatmul.f32.gmra.mxu0 %v1532
    %v1534 = vpop.f32.mrf.mxu0
    %v1535 = vadd.f32 %v1310, %v1534
    %1536 = vdwg.mxu0
    %v1537 = vand.u32 %v173, 4294901760
    %1538 = vmatpush.msra.mxu0 %v1537
    %v1539 = vand.u32 %v172, 4294901760
    %1540 = vmatpush.msra.mxu0 %v1539
    %v1541 = vand.u32 %v171, 4294901760
    %1542 = vmatpush.msra.mxu0 %v1541
    %v1543 = vand.u32 %v170, 4294901760
    %1544 = vmatpush.msra.mxu0 %v1543
    %v1545 = vand.u32 %v169, 4294901760
    %1546 = vmatpush.msra.mxu0 %v1545
    %v1547 = vand.u32 %v168, 4294901760
    %1548 = vmatpush.msra.mxu0 %v1547
    %v1549 = vand.u32 %v167, 4294901760
    %1550 = vmatpush.msra.mxu0 %v1549
    %v1551 = vand.u32 %v166, 4294901760
    %1552 = vmatpush.msra.mxu0 %v1551
    %v1553 = vand.u32 %v165, 4294901760
    %1554 = vmatpush.msra.mxu0 %v1553
    %v1555 = vand.u32 %v164, 4294901760
    %1556 = vmatpush.msra.mxu0 %v1555
    %v1557 = vand.u32 %v163, 4294901760
    %1558 = vmatpush.msra.mxu0 %v1557
    %v1559 = vand.u32 %v162, 4294901760
    %1560 = vmatpush.msra.mxu0 %v1559
    %v1561 = vand.u32 %v161, 4294901760
    %1562 = vmatpush.msra.mxu0 %v1561
    %v1563 = vand.u32 %v160, 4294901760
    %1564 = vmatpush.msra.mxu0 %v1563
    %v1565 = vand.u32 %v159, 4294901760
    %1566 = vmatpush.msra.mxu0 %v1565
    %v1567 = vand.u32 %v158, 4294901760
    %1568 = vmatpush.msra.mxu0 %v1567
    %v1569 = vand.u32 %v118, 4294901760
    %1570 = vmatmul.f32.gmra.mxu0 %v1569
    %v1571 = vpop.f32.mrf.mxu0
    %v1572 = vadd.f32 %v1379, %v1571
    %v1573 = vand.u32 %v119, 4294901760
    %1574 = vmatmul.f32.gmra.mxu0 %v1573
    %v1575 = vpop.f32.mrf.mxu0
    %v1576 = vadd.f32 %v1383, %v1575
    %v1577 = vand.u32 %v120, 4294901760
    %1578 = vmatmul.f32.gmra.mxu0 %v1577
    %v1579 = vpop.f32.mrf.mxu0
    %v1580 = vadd.f32 %v1387, %v1579
    %v1581 = vand.u32 %v121, 4294901760
    %1582 = vmatmul.f32.gmra.mxu0 %v1581
    %v1583 = vpop.f32.mrf.mxu0
    %v1584 = vadd.f32 %v1391, %v1583
    %v1585 = vand.u32 %v122, 4294901760
    %1586 = vmatmul.f32.gmra.mxu0 %v1585
    %v1587 = vpop.f32.mrf.mxu0
    %v1588 = vadd.f32 %v1395, %v1587
    %v1589 = vand.u32 %v123, 4294901760
    %1590 = vmatmul.f32.gmra.mxu0 %v1589
    %v1591 = vpop.f32.mrf.mxu0
    %v1592 = vadd.f32 %v1399, %v1591
    %v1593 = vand.u32 %v124, 4294901760
    %1594 = vmatmul.f32.gmra.mxu0 %v1593
    %v1595 = vpop.f32.mrf.mxu0
    %v1596 = vadd.f32 %v1403, %v1595
    %v1597 = vand.u32 %v125, 4294901760
    %1598 = vmatmul.f32.gmra.mxu0 %v1597
    %v1599 = vpop.f32.mrf.mxu0
    %v1600 = vadd.f32 %v1407, %v1599
    %v1601 = vand.u32 %v126, 4294901760
    %1602 = vmatmul.f32.gmra.mxu0 %v1601
    %v1603 = vpop.f32.mrf.mxu0
    %v1604 = vadd.f32 %v1411, %v1603
    %v1605 = vand.u32 %v127, 4294901760
    %1606 = vmatmul.f32.gmra.mxu0 %v1605
    %v1607 = vpop.f32.mrf.mxu0
    %v1608 = vadd.f32 %v1415, %v1607
    %v1609 = vand.u32 %v128, 4294901760
    %1610 = vmatmul.f32.gmra.mxu0 %v1609
    %v1611 = vpop.f32.mrf.mxu0
    %v1612 = vadd.f32 %v1419, %v1611
    %v1613 = vand.u32 %v129, 4294901760
    %1614 = vmatmul.f32.gmra.mxu0 %v1613
    %v1615 = vpop.f32.mrf.mxu0
    %v1616 = vadd.f32 %v1423, %v1615
    %v1617 = vand.u32 %v130, 4294901760
    %1618 = vmatmul.f32.gmra.mxu0 %v1617
    %v1619 = vpop.f32.mrf.mxu0
    %v1620 = vadd.f32 %v1427, %v1619
    %v1621 = vand.u32 %v131, 4294901760
    %1622 = vmatmul.f32.gmra.mxu0 %v1621
    %v1623 = vpop.f32.mrf.mxu0
    %v1624 = vadd.f32 %v1431, %v1623
    %v1625 = vand.u32 %v132, 4294901760
    %1626 = vmatmul.f32.gmra.mxu0 %v1625
    %v1627 = vpop.f32.mrf.mxu0
    %v1628 = vadd.f32 %v1435, %v1627
    %v1629 = vand.u32 %v133, 4294901760
    %1630 = vmatmul.f32.gmra.mxu0 %v1629
    %v1631 = vpop.f32.mrf.mxu0
    %v1632 = vadd.f32 %v1439, %v1631
    %v1633 = vand.u32 %v134, 4294901760
    %1634 = vmatmul.f32.gmra.mxu0 %v1633
    %v1635 = vpop.f32.mrf.mxu0
    %v1636 = vadd.f32 %v1443, %v1635
    %v1637 = vand.u32 %v135, 4294901760
    %1638 = vmatmul.f32.gmra.mxu0 %v1637
    %v1639 = vpop.f32.mrf.mxu0
    %v1640 = vadd.f32 %v1447, %v1639
    %v1641 = vand.u32 %v136, 4294901760
    %1642 = vmatmul.f32.gmra.mxu0 %v1641
    %v1643 = vpop.f32.mrf.mxu0
    %v1644 = vadd.f32 %v1451, %v1643
    %v1645 = vand.u32 %v137, 4294901760
    %1646 = vmatmul.f32.gmra.mxu0 %v1645
    %v1647 = vpop.f32.mrf.mxu0
    %v1648 = vadd.f32 %v1455, %v1647
    %v1649 = vand.u32 %v138, 4294901760
    %1650 = vmatmul.f32.gmra.mxu0 %v1649
    %v1651 = vpop.f32.mrf.mxu0
    %v1652 = vadd.f32 %v1459, %v1651
    %v1653 = vand.u32 %v139, 4294901760
    %1654 = vmatmul.f32.gmra.mxu0 %v1653
    %v1655 = vpop.f32.mrf.mxu0
    %v1656 = vadd.f32 %v1463, %v1655
    %v1657 = vand.u32 %v140, 4294901760
    %1658 = vmatmul.f32.gmra.mxu0 %v1657
    %v1659 = vpop.f32.mrf.mxu0
    %v1660 = vadd.f32 %v1467, %v1659
    %v1661 = vand.u32 %v141, 4294901760
    %1662 = vmatmul.f32.gmra.mxu0 %v1661
    %v1663 = vpop.f32.mrf.mxu0
    %v1664 = vadd.f32 %v1471, %v1663
    %v1665 = vand.u32 %v142, 4294901760
    %1666 = vmatmul.f32.gmra.mxu0 %v1665
    %v1667 = vpop.f32.mrf.mxu0
    %v1668 = vadd.f32 %v1475, %v1667
    %v1669 = vand.u32 %v143, 4294901760
    %1670 = vmatmul.f32.gmra.mxu0 %v1669
    %v1671 = vpop.f32.mrf.mxu0
    %v1672 = vadd.f32 %v1479, %v1671
    %v1673 = vand.u32 %v144, 4294901760
    %1674 = vmatmul.f32.gmra.mxu0 %v1673
    %v1675 = vpop.f32.mrf.mxu0
    %v1676 = vadd.f32 %v1483, %v1675
    %v1677 = vand.u32 %v145, 4294901760
    %1678 = vmatmul.f32.gmra.mxu0 %v1677
    %v1679 = vpop.f32.mrf.mxu0
    %v1680 = vadd.f32 %v1487, %v1679
    %v1681 = vand.u32 %v146, 4294901760
    %1682 = vmatmul.f32.gmra.mxu0 %v1681
    %v1683 = vpop.f32.mrf.mxu0
    %v1684 = vadd.f32 %v1491, %v1683
    %v1685 = vand.u32 %v147, 4294901760
    %1686 = vmatmul.f32.gmra.mxu0 %v1685
    %v1687 = vpop.f32.mrf.mxu0
    %v1688 = vadd.f32 %v1495, %v1687
    %v1689 = vand.u32 %v148, 4294901760
    %1690 = vmatmul.f32.gmra.mxu0 %v1689
    %v1691 = vpop.f32.mrf.mxu0
    %v1692 = vadd.f32 %v1499, %v1691
    %v1693 = vand.u32 %v149, 4294901760
    %1694 = vmatmul.f32.gmra.mxu0 %v1693
    %v1695 = vpop.f32.mrf.mxu0
    %v1696 = vadd.f32 %v1503, %v1695
    %v1697 = vand.u32 %v150, 4294901760
    %1698 = vmatmul.f32.gmra.mxu0 %v1697
    %v1699 = vpop.f32.mrf.mxu0
    %v1700 = vadd.f32 %v1507, %v1699
    %v1701 = vand.u32 %v151, 4294901760
    %1702 = vmatmul.f32.gmra.mxu0 %v1701
    %v1703 = vpop.f32.mrf.mxu0
    %v1704 = vadd.f32 %v1511, %v1703
    %v1705 = vand.u32 %v152, 4294901760
    %1706 = vmatmul.f32.gmra.mxu0 %v1705
    %v1707 = vpop.f32.mrf.mxu0
    %v1708 = vadd.f32 %v1515, %v1707
    %v1709 = vand.u32 %v153, 4294901760
    %1710 = vmatmul.f32.gmra.mxu0 %v1709
    %v1711 = vpop.f32.mrf.mxu0
    %v1712 = vadd.f32 %v1519, %v1711
    %v1713 = vand.u32 %v154, 4294901760
    %1714 = vmatmul.f32.gmra.mxu0 %v1713
    %v1715 = vpop.f32.mrf.mxu0
    %v1716 = vadd.f32 %v1523, %v1715
    %v1717 = vand.u32 %v155, 4294901760
    %1718 = vmatmul.f32.gmra.mxu0 %v1717
    %v1719 = vpop.f32.mrf.mxu0
    %v1720 = vadd.f32 %v1527, %v1719
    %v1721 = vand.u32 %v156, 4294901760
    %1722 = vmatmul.f32.gmra.mxu0 %v1721
    %v1723 = vpop.f32.mrf.mxu0
    %v1724 = vadd.f32 %v1531, %v1723
    %v1725 = vand.u32 %v157, 4294901760
    %1726 = vmatmul.f32.gmra.mxu0 %v1725
    %v1727 = vpop.f32.mrf.mxu0
    %v1728 = vadd.f32 %v1535, %v1727
    %1729 = vdwg.mxu0
    %v1730 = vxor.u32 %v1572, 2147483648
    %v1731 = vxor.u32 %v1576, 2147483648
    %v1732 = vxor.u32 %v1580, 2147483648
    %v1733 = vxor.u32 %v1584, 2147483648
    %v1734 = vxor.u32 %v1588, 2147483648
    %v1735 = vxor.u32 %v1592, 2147483648
    %v1736 = vxor.u32 %v1596, 2147483648
    %v1737 = vxor.u32 %v1600, 2147483648
    %v1738 = vxor.u32 %v1604, 2147483648
    %v1739 = vxor.u32 %v1608, 2147483648
    %v1740 = vxor.u32 %v1612, 2147483648
    %v1741 = vxor.u32 %v1616, 2147483648
    %v1742 = vxor.u32 %v1620, 2147483648
    %v1743 = vxor.u32 %v1624, 2147483648
    %v1744 = vxor.u32 %v1628, 2147483648
    %v1745 = vxor.u32 %v1632, 2147483648
    %v1746 = vxor.u32 %v1636, 2147483648
    %v1747 = vxor.u32 %v1640, 2147483648
    %v1748 = vxor.u32 %v1644, 2147483648
    %v1749 = vxor.u32 %v1648, 2147483648
    %v1750 = vxor.u32 %v1652, 2147483648
    %v1751 = vxor.u32 %v1656, 2147483648
    %v1752 = vxor.u32 %v1660, 2147483648
    %v1753 = vxor.u32 %v1664, 2147483648
    %v1754 = vxor.u32 %v1668, 2147483648
    %v1755 = vxor.u32 %v1672, 2147483648
    %v1756 = vxor.u32 %v1676, 2147483648
    %v1757 = vxor.u32 %v1680, 2147483648
    %v1758 = vxor.u32 %v1684, 2147483648
    %v1759 = vxor.u32 %v1688, 2147483648
    %v1760 = vxor.u32 %v1692, 2147483648
    %v1761 = vxor.u32 %v1696, 2147483648
    %v1762 = vxor.u32 %v1700, 2147483648
    %v1763 = vxor.u32 %v1704, 2147483648
    %v1764 = vxor.u32 %v1708, 2147483648
    %v1765 = vxor.u32 %v1712, 2147483648
    %v1766 = vxor.u32 %v1716, 2147483648
    %v1767 = vxor.u32 %v1720, 2147483648
    %v1768 = vxor.u32 %v1724, 2147483648
    %v1769 = vxor.u32 %v1728, 2147483648
    %v1770 = vmul.f32 %v1730, 1.442695
    %v1771 = vpow.pop %v1770
    %v1772 = vmul.f32 %v1731, 1.442695
    %v1773 = vpow.pop %v1772
    %v1774 = vmul.f32 %v1732, 1.442695
    %v1775 = vpow.pop %v1774
    %v1776 = vmul.f32 %v1733, 1.442695
    %v1777 = vpow.pop %v1776
    %v1778 = vmul.f32 %v1734, 1.442695
    %v1779 = vpow.pop %v1778
    %v1780 = vmul.f32 %v1735, 1.442695
    %v1781 = vpow.pop %v1780
    %v1782 = vmul.f32 %v1736, 1.442695
    %v1783 = vpow.pop %v1782
    %v1784 = vmul.f32 %v1737, 1.442695
    %v1785 = vpow.pop %v1784
    %v1786 = vmul.f32 %v1738, 1.442695
    %v1787 = vpow.pop %v1786
    %v1788 = vmul.f32 %v1739, 1.442695
    %v1789 = vpow.pop %v1788
    %v1790 = vmul.f32 %v1740, 1.442695
    %v1791 = vpow.pop %v1790
    %v1792 = vmul.f32 %v1741, 1.442695
    %v1793 = vpow.pop %v1792
    %v1794 = vmul.f32 %v1742, 1.442695
    %v1795 = vpow.pop %v1794
    %v1796 = vmul.f32 %v1743, 1.442695
    %v1797 = vpow.pop %v1796
    %v1798 = vmul.f32 %v1744, 1.442695
    %v1799 = vpow.pop %v1798
    %v1800 = vmul.f32 %v1745, 1.442695
    %v1801 = vpow.pop %v1800
    %v1802 = vmul.f32 %v1746, 1.442695
    %v1803 = vpow.pop %v1802
    %v1804 = vmul.f32 %v1747, 1.442695
    %v1805 = vpow.pop %v1804
    %v1806 = vmul.f32 %v1748, 1.442695
    %v1807 = vpow.pop %v1806
    %v1808 = vmul.f32 %v1749, 1.442695
    %v1809 = vpow.pop %v1808
    %v1810 = vmul.f32 %v1750, 1.442695
    %v1811 = vpow.pop %v1810
    %v1812 = vmul.f32 %v1751, 1.442695
    %v1813 = vpow.pop %v1812
    %v1814 = vmul.f32 %v1752, 1.442695
    %v1815 = vpow.pop %v1814
    %v1816 = vmul.f32 %v1753, 1.442695
    %v1817 = vpow.pop %v1816
    %v1818 = vmul.f32 %v1754, 1.442695
    %v1819 = vpow.pop %v1818
    %v1820 = vmul.f32 %v1755, 1.442695
    %v1821 = vpow.pop %v1820
    %v1822 = vmul.f32 %v1756, 1.442695
    %v1823 = vpow.pop %v1822
    %v1824 = vmul.f32 %v1757, 1.442695
    %v1825 = vpow.pop %v1824
    %v1826 = vmul.f32 %v1758, 1.442695
    %v1827 = vpow.pop %v1826
    %v1828 = vmul.f32 %v1759, 1.442695
    %v1829 = vpow.pop %v1828
    %v1830 = vmul.f32 %v1760, 1.442695
    %v1831 = vpow.pop %v1830
    %v1832 = vmul.f32 %v1761, 1.442695
    %v1833 = vpow.pop %v1832
    %v1834 = vmul.f32 %v1762, 1.442695
    %v1835 = vpow.pop %v1834
    %v1836 = vmul.f32 %v1763, 1.442695
    %v1837 = vpow.pop %v1836
    %v1838 = vmul.f32 %v1764, 1.442695
    %v1839 = vpow.pop %v1838
    %v1840 = vmul.f32 %v1765, 1.442695
    %v1841 = vpow.pop %v1840
    %v1842 = vmul.f32 %v1766, 1.442695
    %v1843 = vpow.pop %v1842
    %v1844 = vmul.f32 %v1767, 1.442695
    %v1845 = vpow.pop %v1844
    %v1846 = vmul.f32 %v1768, 1.442695
    %v1847 = vpow.pop %v1846
    %v1848 = vmul.f32 %v1769, 1.442695
    %v1849 = vpow.pop %v1848
    %v1850 = vadd.f32 %v1771, 1.0
    %v1851 = vadd.f32 %v1773, 1.0
    %v1852 = vadd.f32 %v1775, 1.0
    %v1853 = vadd.f32 %v1777, 1.0
    %v1854 = vadd.f32 %v1779, 1.0
    %v1855 = vadd.f32 %v1781, 1.0
    %v1856 = vadd.f32 %v1783, 1.0
    %v1857 = vadd.f32 %v1785, 1.0
    %v1858 = vadd.f32 %v1787, 1.0
    %v1859 = vadd.f32 %v1789, 1.0
    %v1860 = vadd.f32 %v1791, 1.0
    %v1861 = vadd.f32 %v1793, 1.0
    %v1862 = vadd.f32 %v1795, 1.0
    %v1863 = vadd.f32 %v1797, 1.0
    %v1864 = vadd.f32 %v1799, 1.0
    %v1865 = vadd.f32 %v1801, 1.0
    %v1866 = vadd.f32 %v1803, 1.0
    %v1867 = vadd.f32 %v1805, 1.0
    %v1868 = vadd.f32 %v1807, 1.0
    %v1869 = vadd.f32 %v1809, 1.0
    %v1870 = vadd.f32 %v1811, 1.0
    %v1871 = vadd.f32 %v1813, 1.0
    %v1872 = vadd.f32 %v1815, 1.0
    %v1873 = vadd.f32 %v1817, 1.0
    %v1874 = vadd.f32 %v1819, 1.0
    %v1875 = vadd.f32 %v1821, 1.0
    %v1876 = vadd.f32 %v1823, 1.0
    %v1877 = vadd.f32 %v1825, 1.0
    %v1878 = vadd.f32 %v1827, 1.0
    %v1879 = vadd.f32 %v1829, 1.0
    %v1880 = vadd.f32 %v1831, 1.0
    %v1881 = vadd.f32 %v1833, 1.0
    %v1882 = vadd.f32 %v1835, 1.0
    %v1883 = vadd.f32 %v1837, 1.0
    %v1884 = vadd.f32 %v1839, 1.0
    %v1885 = vadd.f32 %v1841, 1.0
    %v1886 = vadd.f32 %v1843, 1.0
    %v1887 = vadd.f32 %v1845, 1.0
    %v1888 = vadd.f32 %v1847, 1.0
    %v1889 = vadd.f32 %v1849, 1.0
    %v1890 = vrcp.pop %v1850
    %v1891 = vmul.f32 %v1850, %v1890
    %v1892 = vsub.f32 1.0, %v1891
    %v1893 = vmul.f32 %v1890, %v1892
    %v1894 = vadd.f32 %v1890, %v1893
    %vm1895 = vweird.f32 %v1850
    %vm1896 = vweird.f32 %v1890
    %vm1897 = vmor %vm1895, %vm1896
    %v1898 = vsel %vm1897, %v1890, %v1894
    %v1899 = vand.u32 2147483647, %v1850
    %vm1900 = vcmp.eq.f32.partialorder %v1899, 8.507059e+37
    %v1901 = vand.u32 %v1850, 2147483648
    %v1902 = vor.u32 1.1754944e-38, %v1901
    %v1903 = vsel %vm1900, %v1902, %v1898
    %v1904 = vmul.f32 1.0, %v1903
    %v1905 = vrcp.pop %v1851
    %v1906 = vmul.f32 %v1851, %v1905
    %v1907 = vsub.f32 1.0, %v1906
    %v1908 = vmul.f32 %v1905, %v1907
    %v1909 = vadd.f32 %v1905, %v1908
    %vm1910 = vweird.f32 %v1851
    %vm1911 = vweird.f32 %v1905
    %vm1912 = vmor %vm1910, %vm1911
    %v1913 = vsel %vm1912, %v1905, %v1909
    %v1914 = vand.u32 2147483647, %v1851
    %vm1915 = vcmp.eq.f32.partialorder %v1914, 8.507059e+37
    %v1916 = vand.u32 %v1851, 2147483648
    %v1917 = vor.u32 1.1754944e-38, %v1916
    %v1918 = vsel %vm1915, %v1917, %v1913
    %v1919 = vmul.f32 1.0, %v1918
    %v1920 = vrcp.pop %v1852
    %v1921 = vmul.f32 %v1852, %v1920
    %v1922 = vsub.f32 1.0, %v1921
    %v1923 = vmul.f32 %v1920, %v1922
    %v1924 = vadd.f32 %v1920, %v1923
    %vm1925 = vweird.f32 %v1852
    %vm1926 = vweird.f32 %v1920
    %vm1927 = vmor %vm1925, %vm1926
    %v1928 = vsel %vm1927, %v1920, %v1924
    %v1929 = vand.u32 2147483647, %v1852
    %vm1930 = vcmp.eq.f32.partialorder %v1929, 8.507059e+37
    %v1931 = vand.u32 %v1852, 2147483648
    %v1932 = vor.u32 1.1754944e-38, %v1931
    %v1933 = vsel %vm1930, %v1932, %v1928
    %v1934 = vmul.f32 1.0, %v1933
    %v1935 = vrcp.pop %v1853
    %v1936 = vmul.f32 %v1853, %v1935
    %v1937 = vsub.f32 1.0, %v1936
    %v1938 = vmul.f32 %v1935, %v1937
    %v1939 = vadd.f32 %v1935, %v1938
    %vm1940 = vweird.f32 %v1853
    %vm1941 = vweird.f32 %v1935
    %vm1942 = vmor %vm1940, %vm1941
    %v1943 = vsel %vm1942, %v1935, %v1939
    %v1944 = vand.u32 2147483647, %v1853
    %vm1945 = vcmp.eq.f32.partialorder %v1944, 8.507059e+37
    %v1946 = vand.u32 %v1853, 2147483648
    %v1947 = vor.u32 1.1754944e-38, %v1946
    %v1948 = vsel %vm1945, %v1947, %v1943
    %v1949 = vmul.f32 1.0, %v1948
    %v1950 = vrcp.pop %v1854
    %v1951 = vmul.f32 %v1854, %v1950
    %v1952 = vsub.f32 1.0, %v1951
    %v1953 = vmul.f32 %v1950, %v1952
    %v1954 = vadd.f32 %v1950, %v1953
    %vm1955 = vweird.f32 %v1854
    %vm1956 = vweird.f32 %v1950
    %vm1957 = vmor %vm1955, %vm1956
    %v1958 = vsel %vm1957, %v1950, %v1954
    %v1959 = vand.u32 2147483647, %v1854
    %vm1960 = vcmp.eq.f32.partialorder %v1959, 8.507059e+37
    %v1961 = vand.u32 %v1854, 2147483648
    %v1962 = vor.u32 1.1754944e-38, %v1961
    %v1963 = vsel %vm1960, %v1962, %v1958
    %v1964 = vmul.f32 1.0, %v1963
    %v1965 = vrcp.pop %v1855
    %v1966 = vmul.f32 %v1855, %v1965
    %v1967 = vsub.f32 1.0, %v1966
    %v1968 = vmul.f32 %v1965, %v1967
    %v1969 = vadd.f32 %v1965, %v1968
    %vm1970 = vweird.f32 %v1855
    %vm1971 = vweird.f32 %v1965
    %vm1972 = vmor %vm1970, %vm1971
    %v1973 = vsel %vm1972, %v1965, %v1969
    %v1974 = vand.u32 2147483647, %v1855
    %vm1975 = vcmp.eq.f32.partialorder %v1974, 8.507059e+37
    %v1976 = vand.u32 %v1855, 2147483648
    %v1977 = vor.u32 1.1754944e-38, %v1976
    %v1978 = vsel %vm1975, %v1977, %v1973
    %v1979 = vmul.f32 1.0, %v1978
    %v1980 = vrcp.pop %v1856
    %v1981 = vmul.f32 %v1856, %v1980
    %v1982 = vsub.f32 1.0, %v1981
    %v1983 = vmul.f32 %v1980, %v1982
    %v1984 = vadd.f32 %v1980, %v1983
    %vm1985 = vweird.f32 %v1856
    %vm1986 = vweird.f32 %v1980
    %vm1987 = vmor %vm1985, %vm1986
    %v1988 = vsel %vm1987, %v1980, %v1984
    %v1989 = vand.u32 2147483647, %v1856
    %vm1990 = vcmp.eq.f32.partialorder %v1989, 8.507059e+37
    %v1991 = vand.u32 %v1856, 2147483648
    %v1992 = vor.u32 1.1754944e-38, %v1991
    %v1993 = vsel %vm1990, %v1992, %v1988
    %v1994 = vmul.f32 1.0, %v1993
    %v1995 = vrcp.pop %v1857
    %v1996 = vmul.f32 %v1857, %v1995
    %v1997 = vsub.f32 1.0, %v1996
    %v1998 = vmul.f32 %v1995, %v1997
    %v1999 = vadd.f32 %v1995, %v1998
    %vm2000 = vweird.f32 %v1857
    %vm2001 = vweird.f32 %v1995
    %vm2002 = vmor %vm2000, %vm2001
    %v2003 = vsel %vm2002, %v1995, %v1999
    %v2004 = vand.u32 2147483647, %v1857
    %vm2005 = vcmp.eq.f32.partialorder %v2004, 8.507059e+37
    %v2006 = vand.u32 %v1857, 2147483648
    %v2007 = vor.u32 1.1754944e-38, %v2006
    %v2008 = vsel %vm2005, %v2007, %v2003
    %v2009 = vmul.f32 1.0, %v2008
    %v2010 = vrcp.pop %v1858
    %v2011 = vmul.f32 %v1858, %v2010
    %v2012 = vsub.f32 1.0, %v2011
    %v2013 = vmul.f32 %v2010, %v2012
    %v2014 = vadd.f32 %v2010, %v2013
    %vm2015 = vweird.f32 %v1858
    %vm2016 = vweird.f32 %v2010
    %vm2017 = vmor %vm2015, %vm2016
    %v2018 = vsel %vm2017, %v2010, %v2014
    %v2019 = vand.u32 2147483647, %v1858
    %vm2020 = vcmp.eq.f32.partialorder %v2019, 8.507059e+37
    %v2021 = vand.u32 %v1858, 2147483648
    %v2022 = vor.u32 1.1754944e-38, %v2021
    %v2023 = vsel %vm2020, %v2022, %v2018
    %v2024 = vmul.f32 1.0, %v2023
    %v2025 = vrcp.pop %v1859
    %v2026 = vmul.f32 %v1859, %v2025
    %v2027 = vsub.f32 1.0, %v2026
    %v2028 = vmul.f32 %v2025, %v2027
    %v2029 = vadd.f32 %v2025, %v2028
    %vm2030 = vweird.f32 %v1859
    %vm2031 = vweird.f32 %v2025
    %vm2032 = vmor %vm2030, %vm2031
    %v2033 = vsel %vm2032, %v2025, %v2029
    %v2034 = vand.u32 2147483647, %v1859
    %vm2035 = vcmp.eq.f32.partialorder %v2034, 8.507059e+37
    %v2036 = vand.u32 %v1859, 2147483648
    %v2037 = vor.u32 1.1754944e-38, %v2036
    %v2038 = vsel %vm2035, %v2037, %v2033
    %v2039 = vmul.f32 1.0, %v2038
    %v2040 = vrcp.pop %v1860
    %v2041 = vmul.f32 %v1860, %v2040
    %v2042 = vsub.f32 1.0, %v2041
    %v2043 = vmul.f32 %v2040, %v2042
    %v2044 = vadd.f32 %v2040, %v2043
    %vm2045 = vweird.f32 %v1860
    %vm2046 = vweird.f32 %v2040
    %vm2047 = vmor %vm2045, %vm2046
    %v2048 = vsel %vm2047, %v2040, %v2044
    %v2049 = vand.u32 2147483647, %v1860
    %vm2050 = vcmp.eq.f32.partialorder %v2049, 8.507059e+37
    %v2051 = vand.u32 %v1860, 2147483648
    %v2052 = vor.u32 1.1754944e-38, %v2051
    %v2053 = vsel %vm2050, %v2052, %v2048
    %v2054 = vmul.f32 1.0, %v2053
    %v2055 = vrcp.pop %v1861
    %v2056 = vmul.f32 %v1861, %v2055
    %v2057 = vsub.f32 1.0, %v2056
    %v2058 = vmul.f32 %v2055, %v2057
    %v2059 = vadd.f32 %v2055, %v2058
    %vm2060 = vweird.f32 %v1861
    %vm2061 = vweird.f32 %v2055
    %vm2062 = vmor %vm2060, %vm2061
    %v2063 = vsel %vm2062, %v2055, %v2059
    %v2064 = vand.u32 2147483647, %v1861
    %vm2065 = vcmp.eq.f32.partialorder %v2064, 8.507059e+37
    %v2066 = vand.u32 %v1861, 2147483648
    %v2067 = vor.u32 1.1754944e-38, %v2066
    %v2068 = vsel %vm2065, %v2067, %v2063
    %v2069 = vmul.f32 1.0, %v2068
    %v2070 = vrcp.pop %v1862
    %v2071 = vmul.f32 %v1862, %v2070
    %v2072 = vsub.f32 1.0, %v2071
    %v2073 = vmul.f32 %v2070, %v2072
    %v2074 = vadd.f32 %v2070, %v2073
    %vm2075 = vweird.f32 %v1862
    %vm2076 = vweird.f32 %v2070
    %vm2077 = vmor %vm2075, %vm2076
    %v2078 = vsel %vm2077, %v2070, %v2074
    %v2079 = vand.u32 2147483647, %v1862
    %vm2080 = vcmp.eq.f32.partialorder %v2079, 8.507059e+37
    %v2081 = vand.u32 %v1862, 2147483648
    %v2082 = vor.u32 1.1754944e-38, %v2081
    %v2083 = vsel %vm2080, %v2082, %v2078
    %v2084 = vmul.f32 1.0, %v2083
    %v2085 = vrcp.pop %v1863
    %v2086 = vmul.f32 %v1863, %v2085
    %v2087 = vsub.f32 1.0, %v2086
    %v2088 = vmul.f32 %v2085, %v2087
    %v2089 = vadd.f32 %v2085, %v2088
    %vm2090 = vweird.f32 %v1863
    %vm2091 = vweird.f32 %v2085
    %vm2092 = vmor %vm2090, %vm2091
    %v2093 = vsel %vm2092, %v2085, %v2089
    %v2094 = vand.u32 2147483647, %v1863
    %vm2095 = vcmp.eq.f32.partialorder %v2094, 8.507059e+37
    %v2096 = vand.u32 %v1863, 2147483648
    %v2097 = vor.u32 1.1754944e-38, %v2096
    %v2098 = vsel %vm2095, %v2097, %v2093
    %v2099 = vmul.f32 1.0, %v2098
    %v2100 = vrcp.pop %v1864
    %v2101 = vmul.f32 %v1864, %v2100
    %v2102 = vsub.f32 1.0, %v2101
    %v2103 = vmul.f32 %v2100, %v2102
    %v2104 = vadd.f32 %v2100, %v2103
    %vm2105 = vweird.f32 %v1864
    %vm2106 = vweird.f32 %v2100
    %vm2107 = vmor %vm2105, %vm2106
    %v2108 = vsel %vm2107, %v2100, %v2104
    %v2109 = vand.u32 2147483647, %v1864
    %vm2110 = vcmp.eq.f32.partialorder %v2109, 8.507059e+37
    %v2111 = vand.u32 %v1864, 2147483648
    %v2112 = vor.u32 1.1754944e-38, %v2111
    %v2113 = vsel %vm2110, %v2112, %v2108
    %v2114 = vmul.f32 1.0, %v2113
    %v2115 = vrcp.pop %v1865
    %v2116 = vmul.f32 %v1865, %v2115
    %v2117 = vsub.f32 1.0, %v2116
    %v2118 = vmul.f32 %v2115, %v2117
    %v2119 = vadd.f32 %v2115, %v2118
    %vm2120 = vweird.f32 %v1865
    %vm2121 = vweird.f32 %v2115
    %vm2122 = vmor %vm2120, %vm2121
    %v2123 = vsel %vm2122, %v2115, %v2119
    %v2124 = vand.u32 2147483647, %v1865
    %vm2125 = vcmp.eq.f32.partialorder %v2124, 8.507059e+37
    %v2126 = vand.u32 %v1865, 2147483648
    %v2127 = vor.u32 1.1754944e-38, %v2126
    %v2128 = vsel %vm2125, %v2127, %v2123
    %v2129 = vmul.f32 1.0, %v2128
    %v2130 = vrcp.pop %v1866
    %v2131 = vmul.f32 %v1866, %v2130
    %v2132 = vsub.f32 1.0, %v2131
    %v2133 = vmul.f32 %v2130, %v2132
    %v2134 = vadd.f32 %v2130, %v2133
    %vm2135 = vweird.f32 %v1866
    %vm2136 = vweird.f32 %v2130
    %vm2137 = vmor %vm2135, %vm2136
    %v2138 = vsel %vm2137, %v2130, %v2134
    %v2139 = vand.u32 2147483647, %v1866
    %vm2140 = vcmp.eq.f32.partialorder %v2139, 8.507059e+37
    %v2141 = vand.u32 %v1866, 2147483648
    %v2142 = vor.u32 1.1754944e-38, %v2141
    %v2143 = vsel %vm2140, %v2142, %v2138
    %v2144 = vmul.f32 1.0, %v2143
    %v2145 = vrcp.pop %v1867
    %v2146 = vmul.f32 %v1867, %v2145
    %v2147 = vsub.f32 1.0, %v2146
    %v2148 = vmul.f32 %v2145, %v2147
    %v2149 = vadd.f32 %v2145, %v2148
    %vm2150 = vweird.f32 %v1867
    %vm2151 = vweird.f32 %v2145
    %vm2152 = vmor %vm2150, %vm2151
    %v2153 = vsel %vm2152, %v2145, %v2149
    %v2154 = vand.u32 2147483647, %v1867
    %vm2155 = vcmp.eq.f32.partialorder %v2154, 8.507059e+37
    %v2156 = vand.u32 %v1867, 2147483648
    %v2157 = vor.u32 1.1754944e-38, %v2156
    %v2158 = vsel %vm2155, %v2157, %v2153
    %v2159 = vmul.f32 1.0, %v2158
    %v2160 = vrcp.pop %v1868
    %v2161 = vmul.f32 %v1868, %v2160
    %v2162 = vsub.f32 1.0, %v2161
    %v2163 = vmul.f32 %v2160, %v2162
    %v2164 = vadd.f32 %v2160, %v2163
    %vm2165 = vweird.f32 %v1868
    %vm2166 = vweird.f32 %v2160
    %vm2167 = vmor %vm2165, %vm2166
    %v2168 = vsel %vm2167, %v2160, %v2164
    %v2169 = vand.u32 2147483647, %v1868
    %vm2170 = vcmp.eq.f32.partialorder %v2169, 8.507059e+37
    %v2171 = vand.u32 %v1868, 2147483648
    %v2172 = vor.u32 1.1754944e-38, %v2171
    %v2173 = vsel %vm2170, %v2172, %v2168
    %v2174 = vmul.f32 1.0, %v2173
    %v2175 = vrcp.pop %v1869
    %v2176 = vmul.f32 %v1869, %v2175
    %v2177 = vsub.f32 1.0, %v2176
    %v2178 = vmul.f32 %v2175, %v2177
    %v2179 = vadd.f32 %v2175, %v2178
    %vm2180 = vweird.f32 %v1869
    %vm2181 = vweird.f32 %v2175
    %vm2182 = vmor %vm2180, %vm2181
    %v2183 = vsel %vm2182, %v2175, %v2179
    %v2184 = vand.u32 2147483647, %v1869
    %vm2185 = vcmp.eq.f32.partialorder %v2184, 8.507059e+37
    %v2186 = vand.u32 %v1869, 2147483648
    %v2187 = vor.u32 1.1754944e-38, %v2186
    %v2188 = vsel %vm2185, %v2187, %v2183
    %v2189 = vmul.f32 1.0, %v2188
    %v2190 = vrcp.pop %v1870
    %v2191 = vmul.f32 %v1870, %v2190
    %v2192 = vsub.f32 1.0, %v2191
    %v2193 = vmul.f32 %v2190, %v2192
    %v2194 = vadd.f32 %v2190, %v2193
    %vm2195 = vweird.f32 %v1870
    %vm2196 = vweird.f32 %v2190
    %vm2197 = vmor %vm2195, %vm2196
    %v2198 = vsel %vm2197, %v2190, %v2194
    %v2199 = vand.u32 2147483647, %v1870
    %vm2200 = vcmp.eq.f32.partialorder %v2199, 8.507059e+37
    %v2201 = vand.u32 %v1870, 2147483648
    %v2202 = vor.u32 1.1754944e-38, %v2201
    %v2203 = vsel %vm2200, %v2202, %v2198
    %v2204 = vmul.f32 1.0, %v2203
    %v2205 = vrcp.pop %v1871
    %v2206 = vmul.f32 %v1871, %v2205
    %v2207 = vsub.f32 1.0, %v2206
    %v2208 = vmul.f32 %v2205, %v2207
    %v2209 = vadd.f32 %v2205, %v2208
    %vm2210 = vweird.f32 %v1871
    %vm2211 = vweird.f32 %v2205
    %vm2212 = vmor %vm2210, %vm2211
    %v2213 = vsel %vm2212, %v2205, %v2209
    %v2214 = vand.u32 2147483647, %v1871
    %vm2215 = vcmp.eq.f32.partialorder %v2214, 8.507059e+37
    %v2216 = vand.u32 %v1871, 2147483648
    %v2217 = vor.u32 1.1754944e-38, %v2216
    %v2218 = vsel %vm2215, %v2217, %v2213
    %v2219 = vmul.f32 1.0, %v2218
    %v2220 = vrcp.pop %v1872
    %v2221 = vmul.f32 %v1872, %v2220
    %v2222 = vsub.f32 1.0, %v2221
    %v2223 = vmul.f32 %v2220, %v2222
    %v2224 = vadd.f32 %v2220, %v2223
    %vm2225 = vweird.f32 %v1872
    %vm2226 = vweird.f32 %v2220
    %vm2227 = vmor %vm2225, %vm2226
    %v2228 = vsel %vm2227, %v2220, %v2224
    %v2229 = vand.u32 2147483647, %v1872
    %vm2230 = vcmp.eq.f32.partialorder %v2229, 8.507059e+37
    %v2231 = vand.u32 %v1872, 2147483648
    %v2232 = vor.u32 1.1754944e-38, %v2231
    %v2233 = vsel %vm2230, %v2232, %v2228
    %v2234 = vmul.f32 1.0, %v2233
    %v2235 = vrcp.pop %v1873
    %v2236 = vmul.f32 %v1873, %v2235
    %v2237 = vsub.f32 1.0, %v2236
    %v2238 = vmul.f32 %v2235, %v2237
    %v2239 = vadd.f32 %v2235, %v2238
    %vm2240 = vweird.f32 %v1873
    %vm2241 = vweird.f32 %v2235
    %vm2242 = vmor %vm2240, %vm2241
    %v2243 = vsel %vm2242, %v2235, %v2239
    %v2244 = vand.u32 2147483647, %v1873
    %vm2245 = vcmp.eq.f32.partialorder %v2244, 8.507059e+37
    %v2246 = vand.u32 %v1873, 2147483648
    %v2247 = vor.u32 1.1754944e-38, %v2246
    %v2248 = vsel %vm2245, %v2247, %v2243
    %v2249 = vmul.f32 1.0, %v2248
    %v2250 = vrcp.pop %v1874
    %v2251 = vmul.f32 %v1874, %v2250
    %v2252 = vsub.f32 1.0, %v2251
    %v2253 = vmul.f32 %v2250, %v2252
    %v2254 = vadd.f32 %v2250, %v2253
    %vm2255 = vweird.f32 %v1874
    %vm2256 = vweird.f32 %v2250
    %vm2257 = vmor %vm2255, %vm2256
    %v2258 = vsel %vm2257, %v2250, %v2254
    %v2259 = vand.u32 2147483647, %v1874
    %vm2260 = vcmp.eq.f32.partialorder %v2259, 8.507059e+37
    %v2261 = vand.u32 %v1874, 2147483648
    %v2262 = vor.u32 1.1754944e-38, %v2261
    %v2263 = vsel %vm2260, %v2262, %v2258
    %v2264 = vmul.f32 1.0, %v2263
    %v2265 = vrcp.pop %v1875
    %v2266 = vmul.f32 %v1875, %v2265
    %v2267 = vsub.f32 1.0, %v2266
    %v2268 = vmul.f32 %v2265, %v2267
    %v2269 = vadd.f32 %v2265, %v2268
    %vm2270 = vweird.f32 %v1875
    %vm2271 = vweird.f32 %v2265
    %vm2272 = vmor %vm2270, %vm2271
    %v2273 = vsel %vm2272, %v2265, %v2269
    %v2274 = vand.u32 2147483647, %v1875
    %vm2275 = vcmp.eq.f32.partialorder %v2274, 8.507059e+37
    %v2276 = vand.u32 %v1875, 2147483648
    %v2277 = vor.u32 1.1754944e-38, %v2276
    %v2278 = vsel %vm2275, %v2277, %v2273
    %v2279 = vmul.f32 1.0, %v2278
    %v2280 = vrcp.pop %v1876
    %v2281 = vmul.f32 %v1876, %v2280
    %v2282 = vsub.f32 1.0, %v2281
    %v2283 = vmul.f32 %v2280, %v2282
    %v2284 = vadd.f32 %v2280, %v2283
    %vm2285 = vweird.f32 %v1876
    %vm2286 = vweird.f32 %v2280
    %vm2287 = vmor %vm2285, %vm2286
    %v2288 = vsel %vm2287, %v2280, %v2284
    %v2289 = vand.u32 2147483647, %v1876
    %vm2290 = vcmp.eq.f32.partialorder %v2289, 8.507059e+37
    %v2291 = vand.u32 %v1876, 2147483648
    %v2292 = vor.u32 1.1754944e-38, %v2291
    %v2293 = vsel %vm2290, %v2292, %v2288
    %v2294 = vmul.f32 1.0, %v2293
    %v2295 = vrcp.pop %v1877
    %v2296 = vmul.f32 %v1877, %v2295
    %v2297 = vsub.f32 1.0, %v2296
    %v2298 = vmul.f32 %v2295, %v2297
    %v2299 = vadd.f32 %v2295, %v2298
    %vm2300 = vweird.f32 %v1877
    %vm2301 = vweird.f32 %v2295
    %vm2302 = vmor %vm2300, %vm2301
    %v2303 = vsel %vm2302, %v2295, %v2299
    %v2304 = vand.u32 2147483647, %v1877
    %vm2305 = vcmp.eq.f32.partialorder %v2304, 8.507059e+37
    %v2306 = vand.u32 %v1877, 2147483648
    %v2307 = vor.u32 1.1754944e-38, %v2306
    %v2308 = vsel %vm2305, %v2307, %v2303
    %v2309 = vmul.f32 1.0, %v2308
    %v2310 = vrcp.pop %v1878
    %v2311 = vmul.f32 %v1878, %v2310
    %v2312 = vsub.f32 1.0, %v2311
    %v2313 = vmul.f32 %v2310, %v2312
    %v2314 = vadd.f32 %v2310, %v2313
    %vm2315 = vweird.f32 %v1878
    %vm2316 = vweird.f32 %v2310
    %vm2317 = vmor %vm2315, %vm2316
    %v2318 = vsel %vm2317, %v2310, %v2314
    %v2319 = vand.u32 2147483647, %v1878
    %vm2320 = vcmp.eq.f32.partialorder %v2319, 8.507059e+37
    %v2321 = vand.u32 %v1878, 2147483648
    %v2322 = vor.u32 1.1754944e-38, %v2321
    %v2323 = vsel %vm2320, %v2322, %v2318
    %v2324 = vmul.f32 1.0, %v2323
    %v2325 = vrcp.pop %v1879
    %v2326 = vmul.f32 %v1879, %v2325
    %v2327 = vsub.f32 1.0, %v2326
    %v2328 = vmul.f32 %v2325, %v2327
    %v2329 = vadd.f32 %v2325, %v2328
    %vm2330 = vweird.f32 %v1879
    %vm2331 = vweird.f32 %v2325
    %vm2332 = vmor %vm2330, %vm2331
    %v2333 = vsel %vm2332, %v2325, %v2329
    %v2334 = vand.u32 2147483647, %v1879
    %vm2335 = vcmp.eq.f32.partialorder %v2334, 8.507059e+37
    %v2336 = vand.u32 %v1879, 2147483648
    %v2337 = vor.u32 1.1754944e-38, %v2336
    %v2338 = vsel %vm2335, %v2337, %v2333
    %v2339 = vmul.f32 1.0, %v2338
    %v2340 = vrcp.pop %v1880
    %v2341 = vmul.f32 %v1880, %v2340
    %v2342 = vsub.f32 1.0, %v2341
    %v2343 = vmul.f32 %v2340, %v2342
    %v2344 = vadd.f32 %v2340, %v2343
    %vm2345 = vweird.f32 %v1880
    %vm2346 = vweird.f32 %v2340
    %vm2347 = vmor %vm2345, %vm2346
    %v2348 = vsel %vm2347, %v2340, %v2344
    %v2349 = vand.u32 2147483647, %v1880
    %vm2350 = vcmp.eq.f32.partialorder %v2349, 8.507059e+37
    %v2351 = vand.u32 %v1880, 2147483648
    %v2352 = vor.u32 1.1754944e-38, %v2351
    %v2353 = vsel %vm2350, %v2352, %v2348
    %v2354 = vmul.f32 1.0, %v2353
    %v2355 = vrcp.pop %v1881
    %v2356 = vmul.f32 %v1881, %v2355
    %v2357 = vsub.f32 1.0, %v2356
    %v2358 = vmul.f32 %v2355, %v2357
    %v2359 = vadd.f32 %v2355, %v2358
    %vm2360 = vweird.f32 %v1881
    %vm2361 = vweird.f32 %v2355
    %vm2362 = vmor %vm2360, %vm2361
    %v2363 = vsel %vm2362, %v2355, %v2359
    %v2364 = vand.u32 2147483647, %v1881
    %vm2365 = vcmp.eq.f32.partialorder %v2364, 8.507059e+37
    %v2366 = vand.u32 %v1881, 2147483648
    %v2367 = vor.u32 1.1754944e-38, %v2366
    %v2368 = vsel %vm2365, %v2367, %v2363
    %v2369 = vmul.f32 1.0, %v2368
    %v2370 = vrcp.pop %v1882
    %v2371 = vmul.f32 %v1882, %v2370
    %v2372 = vsub.f32 1.0, %v2371
    %v2373 = vmul.f32 %v2370, %v2372
    %v2374 = vadd.f32 %v2370, %v2373
    %vm2375 = vweird.f32 %v1882
    %vm2376 = vweird.f32 %v2370
    %vm2377 = vmor %vm2375, %vm2376
    %v2378 = vsel %vm2377, %v2370, %v2374
    %v2379 = vand.u32 2147483647, %v1882
    %vm2380 = vcmp.eq.f32.partialorder %v2379, 8.507059e+37
    %v2381 = vand.u32 %v1882, 2147483648
    %v2382 = vor.u32 1.1754944e-38, %v2381
    %v2383 = vsel %vm2380, %v2382, %v2378
    %v2384 = vmul.f32 1.0, %v2383
    %v2385 = vrcp.pop %v1883
    %v2386 = vmul.f32 %v1883, %v2385
    %v2387 = vsub.f32 1.0, %v2386
    %v2388 = vmul.f32 %v2385, %v2387
    %v2389 = vadd.f32 %v2385, %v2388
    %vm2390 = vweird.f32 %v1883
    %vm2391 = vweird.f32 %v2385
    %vm2392 = vmor %vm2390, %vm2391
    %v2393 = vsel %vm2392, %v2385, %v2389
    %v2394 = vand.u32 2147483647, %v1883
    %vm2395 = vcmp.eq.f32.partialorder %v2394, 8.507059e+37
    %v2396 = vand.u32 %v1883, 2147483648
    %v2397 = vor.u32 1.1754944e-38, %v2396
    %v2398 = vsel %vm2395, %v2397, %v2393
    %v2399 = vmul.f32 1.0, %v2398
    %v2400 = vrcp.pop %v1884
    %v2401 = vmul.f32 %v1884, %v2400
    %v2402 = vsub.f32 1.0, %v2401
    %v2403 = vmul.f32 %v2400, %v2402
    %v2404 = vadd.f32 %v2400, %v2403
    %vm2405 = vweird.f32 %v1884
    %vm2406 = vweird.f32 %v2400
    %vm2407 = vmor %vm2405, %vm2406
    %v2408 = vsel %vm2407, %v2400, %v2404
    %v2409 = vand.u32 2147483647, %v1884
    %vm2410 = vcmp.eq.f32.partialorder %v2409, 8.507059e+37
    %v2411 = vand.u32 %v1884, 2147483648
    %v2412 = vor.u32 1.1754944e-38, %v2411
    %v2413 = vsel %vm2410, %v2412, %v2408
    %v2414 = vmul.f32 1.0, %v2413
    %v2415 = vrcp.pop %v1885
    %v2416 = vmul.f32 %v1885, %v2415
    %v2417 = vsub.f32 1.0, %v2416
    %v2418 = vmul.f32 %v2415, %v2417
    %v2419 = vadd.f32 %v2415, %v2418
    %vm2420 = vweird.f32 %v1885
    %vm2421 = vweird.f32 %v2415
    %vm2422 = vmor %vm2420, %vm2421
    %v2423 = vsel %vm2422, %v2415, %v2419
    %v2424 = vand.u32 2147483647, %v1885
    %vm2425 = vcmp.eq.f32.partialorder %v2424, 8.507059e+37
    %v2426 = vand.u32 %v1885, 2147483648
    %v2427 = vor.u32 1.1754944e-38, %v2426
    %v2428 = vsel %vm2425, %v2427, %v2423
    %v2429 = vmul.f32 1.0, %v2428
    %v2430 = vrcp.pop %v1886
    %v2431 = vmul.f32 %v1886, %v2430
    %v2432 = vsub.f32 1.0, %v2431
    %v2433 = vmul.f32 %v2430, %v2432
    %v2434 = vadd.f32 %v2430, %v2433
    %vm2435 = vweird.f32 %v1886
    %vm2436 = vweird.f32 %v2430
    %vm2437 = vmor %vm2435, %vm2436
    %v2438 = vsel %vm2437, %v2430, %v2434
    %v2439 = vand.u32 2147483647, %v1886
    %vm2440 = vcmp.eq.f32.partialorder %v2439, 8.507059e+37
    %v2441 = vand.u32 %v1886, 2147483648
    %v2442 = vor.u32 1.1754944e-38, %v2441
    %v2443 = vsel %vm2440, %v2442, %v2438
    %v2444 = vmul.f32 1.0, %v2443
    %v2445 = vrcp.pop %v1887
    %v2446 = vmul.f32 %v1887, %v2445
    %v2447 = vsub.f32 1.0, %v2446
    %v2448 = vmul.f32 %v2445, %v2447
    %v2449 = vadd.f32 %v2445, %v2448
    %vm2450 = vweird.f32 %v1887
    %vm2451 = vweird.f32 %v2445
    %vm2452 = vmor %vm2450, %vm2451
    %v2453 = vsel %vm2452, %v2445, %v2449
    %v2454 = vand.u32 2147483647, %v1887
    %vm2455 = vcmp.eq.f32.partialorder %v2454, 8.507059e+37
    %v2456 = vand.u32 %v1887, 2147483648
    %v2457 = vor.u32 1.1754944e-38, %v2456
    %v2458 = vsel %vm2455, %v2457, %v2453
    %v2459 = vmul.f32 1.0, %v2458
    %v2460 = vrcp.pop %v1888
    %v2461 = vmul.f32 %v1888, %v2460
    %v2462 = vsub.f32 1.0, %v2461
    %v2463 = vmul.f32 %v2460, %v2462
    %v2464 = vadd.f32 %v2460, %v2463
    %vm2465 = vweird.f32 %v1888
    %vm2466 = vweird.f32 %v2460
    %vm2467 = vmor %vm2465, %vm2466
    %v2468 = vsel %vm2467, %v2460, %v2464
    %v2469 = vand.u32 2147483647, %v1888
    %vm2470 = vcmp.eq.f32.partialorder %v2469, 8.507059e+37
    %v2471 = vand.u32 %v1888, 2147483648
    %v2472 = vor.u32 1.1754944e-38, %v2471
    %v2473 = vsel %vm2470, %v2472, %v2468
    %v2474 = vmul.f32 1.0, %v2473
    %v2475 = vrcp.pop %v1889
    %v2476 = vmul.f32 %v1889, %v2475
    %v2477 = vsub.f32 1.0, %v2476
    %v2478 = vmul.f32 %v2475, %v2477
    %v2479 = vadd.f32 %v2475, %v2478
    %vm2480 = vweird.f32 %v1889
    %vm2481 = vweird.f32 %v2475
    %vm2482 = vmor %vm2480, %vm2481
    %v2483 = vsel %vm2482, %v2475, %v2479
    %v2484 = vand.u32 2147483647, %v1889
    %vm2485 = vcmp.eq.f32.partialorder %v2484, 8.507059e+37
    %v2486 = vand.u32 %v1889, 2147483648
    %v2487 = vor.u32 1.1754944e-38, %v2486
    %v2488 = vsel %vm2485, %v2487, %v2483
    %v2489 = vmul.f32 1.0, %v2488
    %vm2490 = vcmask 15360
    %2491 = vst.msk [vmem:[%s4] sm:$0xff] %vm2490, %v1904
    %2492 = vst.msk [vmem:[%s4 + $0x8] sm:$0xff] %vm2490, %v1919
    %2493 = vst.msk [vmem:[%s4 + $0x10] sm:$0xff] %vm2490, %v1934
    %2494 = vst.msk [vmem:[%s4 + $0x18] sm:$0xff] %vm2490, %v1949
    %2495 = vst.msk [vmem:[%s4 + $0x20] sm:$0xff] %vm2490, %v1964
    %2496 = vst.msk [vmem:[%s4 + $0x28] sm:$0xff] %vm2490, %v1979
    %2497 = vst.msk [vmem:[%s4 + $0x30] sm:$0xff] %vm2490, %v1994
    %2498 = vst.msk [vmem:[%s4 + $0x38] sm:$0xff] %vm2490, %v2009
    %2499 = vst.msk [vmem:[%s4 + $0x40] sm:$0xff] %vm2490, %v2024
    %2500 = vst.msk [vmem:[%s4 + $0x48] sm:$0xff] %vm2490, %v2039
    %2501 = vst.msk [vmem:[%s4 + $0x50] sm:$0xff] %vm2490, %v2054
    %2502 = vst.msk [vmem:[%s4 + $0x58] sm:$0xff] %vm2490, %v2069
    %2503 = vst.msk [vmem:[%s4 + $0x60] sm:$0xff] %vm2490, %v2084
    %2504 = vst.msk [vmem:[%s4 + $0x68] sm:$0xff] %vm2490, %v2099
    %2505 = vst.msk [vmem:[%s4 + $0x70] sm:$0xff] %vm2490, %v2114
    %2506 = vst.msk [vmem:[%s4 + $0x78] sm:$0xff] %vm2490, %v2129
    %2507 = vst.msk [vmem:[%s4 + $0x80] sm:$0xff] %vm2490, %v2144
    %2508 = vst.msk [vmem:[%s4 + $0x88] sm:$0xff] %vm2490, %v2159
    %2509 = vst.msk [vmem:[%s4 + $0x90] sm:$0xff] %vm2490, %v2174
    %2510 = vst.msk [vmem:[%s4 + $0x98] sm:$0xff] %vm2490, %v2189
    %2511 = vst.msk [vmem:[%s4 + $0xa0] sm:$0xff] %vm2490, %v2204
    %2512 = vst.msk [vmem:[%s4 + $0xa8] sm:$0xff] %vm2490, %v2219
    %2513 = vst.msk [vmem:[%s4 + $0xb0] sm:$0xff] %vm2490, %v2234
    %2514 = vst.msk [vmem:[%s4 + $0xb8] sm:$0xff] %vm2490, %v2249
    %2515 = vst.msk [vmem:[%s4 + $0xc0] sm:$0xff] %vm2490, %v2264
    %2516 = vst.msk [vmem:[%s4 + $0xc8] sm:$0xff] %vm2490, %v2279
    %2517 = vst.msk [vmem:[%s4 + $0xd0] sm:$0xff] %vm2490, %v2294
    %2518 = vst.msk [vmem:[%s4 + $0xd8] sm:$0xff] %vm2490, %v2309
    %2519 = vst.msk [vmem:[%s4 + $0xe0] sm:$0xff] %vm2490, %v2324
    %2520 = vst.msk [vmem:[%s4 + $0xe8] sm:$0xff] %vm2490, %v2339
    %2521 = vst.msk [vmem:[%s4 + $0xf0] sm:$0xff] %vm2490, %v2354
    %2522 = vst.msk [vmem:[%s4 + $0xf8] sm:$0xff] %vm2490, %v2369
    %2523 = vst.msk [vmem:[%s4 + $0x100] sm:$0xff] %vm2490, %v2384
    %2524 = vst.msk [vmem:[%s4 + $0x108] sm:$0xff] %vm2490, %v2399
    %2525 = vst.msk [vmem:[%s4 + $0x110] sm:$0xff] %vm2490, %v2414
    %2526 = vst.msk [vmem:[%s4 + $0x118] sm:$0xff] %vm2490, %v2429
    %2527 = vst.msk [vmem:[%s4 + $0x120] sm:$0xff] %vm2490, %v2444
    %2528 = vst.msk [vmem:[%s4 + $0x128] sm:$0xff] %vm2490, %v2459
    %2529 = vst.msk [vmem:[%s4 + $0x130] sm:$0xff] %vm2490, %v2474
    %2530 = vst.msk [vmem:[%s4 + $0x138] sm:$0xff] %vm2490, %v2489
    // Predicated region
    $region22: #{tpu_custom_call.1} parent=1 // pred_check
      _
    $region23: #{tpu_custom_call.1} parent=1 // pred_check_branch
      %2532 = sbr.rel (0) target = $region25
    $region24: #{tpu_custom_call.1} parent=1 // pred_region
      _
    $region25: #{tpu_custom_call.1} parent=1 // pred_fallthru
      _
    // Predicated region
    $region26: #{tpu_custom_call.1} parent=1 // pred_check
      _
    $region27: #{tpu_custom_call.1} parent=1 // pred_check_branch
      %2534 = sbr.rel (0) target = $region29
    $region28: #{tpu_custom_call.1} parent=1 // pred_region
      _
    $region29: #{tpu_custom_call.1} parent=1 // pred_fallthru
      _
    %2535 = vsyncpa [#allocation4], 1

</llo_original>
